<compile_context>
chip_gen: v7x
topology: tpu7x:2x2x1
jax: 0.10.0
libtpu: 0.0.40
codegen_flags: <defaults>
</compile_context>

<pallas_src>
import jax
import jax.numpy as jnp
from jax.experimental import pallas as pl
from jax.experimental.pallas import tpu as pltpu


def gine_kernel(epe_ref, x0_ref, g_ref, s_ref, pool_ref, e_ref,
                w1_ref, b1_ref, w2_ref, b2_ref, pooled_ref):
    """One grid step == GB graphs (block-diagonal structural matrices)."""
    x = x0_ref[0]            # [Nb, EMB]  f32
    G = g_ref[0]             # [Eb, Nb]   bf16 src one-hot (block-diagonal)
    S = s_ref[0]             # [Nb, Eb]   bf16 dst one-hot (block-diagonal)

    num_layers = w1_ref.shape[0]
    for l in range(num_layers):             # static unroll; L is small
        e = e_ref[0, l]                     # [Eb, EMB] free leading-axis view
        # GINEConv: gather src (bf16 MXU, f32 acc) + relu message + scatter-add dst
        x_src = jnp.dot(G, x.astype(jnp.bfloat16),
                        preferred_element_type=jnp.float32)
        msg = jnp.maximum(x_src + e, 0.0)
        aggr = jnp.dot(S, msg.astype(jnp.bfloat16),
                       preferred_element_type=jnp.float32)
        h = epe_ref[l] * x + aggr           # (1 + eps_l) * x + aggr  (SMEM scalar)
        # GINE mlp with eval-mode BNs folded into the Linears:
        h = jnp.dot(h, w1_ref[l], preferred_element_type=jnp.float32) + b1_ref[l]
        h = jnp.maximum(h, 0.0)
        h = jnp.dot(h, w2_ref[l], preferred_element_type=jnp.float32) + b2_ref[l]
        x = jnp.maximum(h, 0.0)             # outer BN folded; dropout = identity

    # jk='last' -> last x; per-graph mean pool (rows of 1/n weights), lane-dense out.
    pooled_ref[0] = jnp.dot(pool_ref[0], x, preferred_element_type=jnp.float32)


def gine_forward(epe, x0b, Gb, Sb, poolb, eab, we, be,
                 w1f, b1f, w2f, b2f, hw1, hb1, hw2, hb2):
    """Eval-mode forward: edge-embedding + head in XLA, conv stack + pool in Pallas."""
    NS, Nb, EMB = x0b.shape
    Eb = Gb.shape[1]
    GB = poolb.shape[1]
    L = w1f.shape[0]

    # Edge embeddings for all layers, hoisted out of the kernel:
    #   eb[s, l] = ea_block[s] @ we[l] + be[l]        -> [NS, L, Eb, EMB]
    eb = jnp.einsum('sef,lfm->slem', eab, we) + be[None]

    shared = lambda shp: pl.BlockSpec(shp, lambda s: (0, 0, 0))

    pooled = pl.pallas_call(
        gine_kernel,
        out_shape=jax.ShapeDtypeStruct((NS, GB, EMB), jnp.float32),
        grid=(NS,),
        in_specs=[
            pl.BlockSpec(memory_space=pltpu.MemorySpace.SMEM),        # (1+eps), shape (L,)
            pl.BlockSpec((1, Nb, EMB), lambda s: (s, 0, 0)),          # x0 block
            pl.BlockSpec((1, Eb, Nb), lambda s: (s, 0, 0)),           # G (src one-hot, bf16)
            pl.BlockSpec((1, Nb, Eb), lambda s: (s, 0, 0)),           # S (dst one-hot, bf16)
            pl.BlockSpec((1, GB, Nb), lambda s: (s, 0, 0)),           # mean-pool rows
            pl.BlockSpec((1, L, Eb, EMB), lambda s: (s, 0, 0, 0)),    # edge emb, all layers
            shared((L, EMB, EMB)),                                    # w1 (BN folded)
            shared((L, 1, EMB)),                                      # b1
            shared((L, EMB, EMB)),                                    # w2 (BN folded)
            shared((L, 1, EMB)),                                      # b2
        ],
        out_specs=pl.BlockSpec((1, GB, EMB), lambda s: (s, 0, 0)),
        compiler_params=pltpu.CompilerParams(
            dimension_semantics=("parallel",),
            vmem_limit_bytes=32 * 1024 * 1024),
    )(epe, x0b, Gb, Sb, poolb, eb, w1f, b1f, w2f, b2f)

    # Readout head: one batched, lane-dense XLA matmul over all graphs.
    g = pooled.reshape(NS * GB, EMB)
    g = jnp.maximum(g @ hw1 + hb1, 0.0)     # dropout = identity (eval)
    return g @ hw2 + hb2


def reference(eps, x0, G, S, P, ea, we, be, w1, b1, bn1s, bn1b,
              w2, b2, bns, bnb, hw1, hb1, hw2, hb2):
    # Pure-f32 reference of the original (unfolded) eval-mode math.
    x = x0
    for l in range(we.shape[0]):
        e_emb = ea @ we[l] + be[l]
        msg = jnp.maximum(G @ x + e_emb, 0.0)
        h = (1.0 + eps[l]) * x + S @ msg
        h = h @ w1[l] + b1[l]
        h = h * bn1s[l] + bn1b[l]
        h = jnp.maximum(h, 0.0)
        h = h @ w2[l] + b2[l]
        h = h * bns[l] + bnb[l]
        x = jnp.maximum(h, 0.0)
    g = P @ x
    g = jnp.maximum(g @ hw1 + hb1, 0.0)
    return g @ hw2 + hb2


if __name__ == "__main__":
    # 8 graphs x 8 nodes / 16 edges each; emb=128 (module default), 5 layers,
    # edge_dim=7, 4 classes.  GB=4 graphs per grid step -> grid of 2 steps.
    BG, N_PER, E_PER = 8, 8, 16
    GB = 4
    assert BG % GB == 0
    NS = BG // GB                         # grid steps (>= 2 for v7x megacore)
    N, E = BG * N_PER, BG * E_PER
    Nb, Eb = GB * N_PER, GB * E_PER       # per-step block sizes
    EMB, L, EDGE_DIM, NUM_CLASS = 128, 5, 7, 4
    BN_EPS = 1e-5

    key = jax.random.PRNGKey(0)
    ks = jax.random.split(key, 36)

    # ---- synthetic graph data: block-diagonal, contiguous per-graph ids ----
    src_loc = jax.random.randint(ks[0], (BG, E_PER), 0, N_PER)   # local node ids
    dst_loc = jax.random.randint(ks[1], (BG, E_PER), 0, N_PER)
    edge_attr = jax.random.normal(ks[2], (E, EDGE_DIM), jnp.float32)

    # dense global operators for the pure-JAX reference only
    offs = (jnp.arange(BG) * N_PER)[:, None]
    src = (src_loc + offs).reshape(-1)
    dst = (dst_loc + offs).reshape(-1)
    batch = jnp.repeat(jnp.arange(BG), N_PER)
    node_ids = jnp.arange(N)
    G_ref = (src[:, None] == node_ids[None, :]).astype(jnp.float32)       # [E, N]
    S_ref = (node_ids[:, None] == dst[None, :]).astype(jnp.float32)       # [N, E]
    onehot_b = (jnp.arange(BG)[:, None] == batch[None, :]).astype(jnp.float32)
    P_ref = onehot_b / jnp.sum(onehot_b, axis=1, keepdims=True)           # [BG, N]

    # ---- deterministic parameters ----
    node_emb_w = 0.1 * jax.random.normal(ks[3], (1, EMB), jnp.float32)    # Embedding(1, emb)

    def lin(k, fan_in, fan_out):
        return 0.1 * jax.random.normal(k, (fan_in, fan_out), jnp.float32)

    we = jnp.stack([lin(ks[4 + l], EDGE_DIM, EMB) for l in range(L)])     # [L,7,EMB]
    be = 0.05 * jax.random.normal(ks[9], (L, 1, EMB), jnp.float32)
    w1 = jnp.stack([lin(ks[10 + l], EMB, EMB) for l in range(L)])
    b1 = 0.05 * jax.random.normal(ks[15], (L, 1, EMB), jnp.float32)
    w2 = jnp.stack([lin(ks[16 + l], EMB, EMB) for l in range(L)])
    b2 = 0.05 * jax.random.normal(ks[21], (L, 1, EMB), jnp.float32)

    def folded_bn(kg, kb, km, kv):
        gamma = 1.0 + 0.1 * jax.random.normal(kg, (L, 1, EMB), jnp.float32)
        beta = 0.05 * jax.random.normal(kb, (L, 1, EMB), jnp.float32)
        rmean = 0.05 * jax.random.normal(km, (L, 1, EMB), jnp.float32)
        rvar = 1.0 + 0.1 * jnp.abs(jax.random.normal(kv, (L, 1, EMB), jnp.float32))
        scale = gamma / jnp.sqrt(rvar + BN_EPS)
        shift = beta - rmean * scale
        return scale, shift

    bn1s, bn1b = folded_bn(ks[22], ks[23], ks[24], ks[25])   # BN inside GINE mlp
    bns, bnb = folded_bn(ks[26], ks[27], ks[28], ks[29])     # BN after each conv

    hw1 = lin(ks[30], EMB, EMB)
    hb1 = 0.05 * jax.random.normal(ks[31], (1, EMB), jnp.float32)
    hw2 = lin(ks[32], EMB, NUM_CLASS)
    hb2 = 0.05 * jax.random.normal(ks[33], (1, NUM_CLASS), jnp.float32)

    eps = jnp.zeros((L,), jnp.float32)                       # GINEConv eps default 0

    # ---------------- kernel-side parameter / data prep ----------------
    # per-step stacks: GB graphs block-diagonal per grid step
    x0b = jnp.tile(node_emb_w, (NS, Nb, 1))                                     # [NS,Nb,EMB]
    step_off = (jnp.arange(GB) * N_PER)[None, :, None]                          # local -> block ids
    src_blk = (src_loc.reshape(NS, GB, E_PER) + step_off).reshape(NS, Eb)
    dst_blk = (dst_loc.reshape(NS, GB, E_PER) + step_off).reshape(NS, Eb)
    Gb = (src_blk[:, :, None] == jnp.arange(Nb)[None, None, :]).astype(jnp.bfloat16)   # [NS,Eb,Nb]
    Sb = (jnp.arange(Nb)[None, :, None] == dst_blk[:, None, :]).astype(jnp.bfloat16)   # [NS,Nb,Eb]
    node_graph = jnp.repeat(jnp.arange(GB), N_PER)                              # [Nb]
    pool_rows = (jnp.arange(GB)[:, None] == node_graph[None, :]).astype(jnp.float32) / N_PER
    poolb = jnp.tile(pool_rows[None], (NS, 1, 1))                               # [NS,GB,Nb]
    eab = edge_attr.reshape(NS, Eb, EDGE_DIM)                                   # [NS,Eb,7]

    # fold eval-mode BN into the adjacent Linear weights (exact algebra)
    w1f = w1 * bn1s
    b1f = b1 * bn1s + bn1b
    w2f = w2 * bns
    b2f = b2 * bns + bnb

    # (1 + eps) as an SMEM scalar vector
    epe = (1.0 + eps).astype(jnp.float32)                                       # [L]

    fwd = jax.jit(gine_forward)
    out = jax.block_until_ready(fwd(
        epe, x0b, Gb, Sb, poolb, eab, we, be,
        w1f, b1f, w2f, b2f, hw1, hb1, hw2, hb2))

    x0_full = jnp.tile(node_emb_w, (N, 1))
    ref = reference(eps, x0_full, G_ref, S_ref, P_ref, edge_attr, we, be,
                    w1, b1, bn1s, bn1b, w2, b2, bns, bnb, hw1, hb1, hw2, hb2)

    assert out.shape == (BG, NUM_CLASS)
    # Only deviation vs. the f32 reference is bf16 rounding of the x/msg
    # operands of the gather/scatter matmuls (one-hots and f32 accumulation
    # are exact), so this tolerance is conservative.
    assert jnp.allclose(out, ref, atol=2e-2, rtol=2e-2), (out, ref)
    print("KERNEL_OK")
</pallas_src>

<mosaic_0001>
module attributes {stable_mosaic.version = 11 : i64} {
  func.func @gine_kernel(%arg0: i32, %arg1: memref<5xf32, #tpu.memory_space<smem>>, %arg2: memref<1x32x128xf32, #tpu.memory_space<vmem>>, %arg3: memref<1x64x32xbf16, #tpu.memory_space<vmem>>, %arg4: memref<1x32x64xbf16, #tpu.memory_space<vmem>>, %arg5: memref<1x4x32xf32, #tpu.memory_space<vmem>>, %arg6: memref<1x5x64x128xf32, #tpu.memory_space<vmem>>, %arg7: memref<5x128x128xf32, #tpu.memory_space<vmem>>, %arg8: memref<5x1x128xf32, #tpu.memory_space<vmem>>, %arg9: memref<5x128x128xf32, #tpu.memory_space<vmem>>, %arg10: memref<5x1x128xf32, #tpu.memory_space<vmem>>, %arg11: memref<1x4x128xf32, #tpu.memory_space<vmem>>) attributes {dimension_semantics = [#tpu.dimension_semantics<parallel>], iteration_bounds = array<i64: 2>, scalar_prefetch = 0 : i64, scratch_operands = 0 : i64, tpu.core_type = #tpu.core_type<tc>, window_params = [{transform_indices = @transform_0, window_bounds = array<i64: 5>}, {transform_indices = @transform_1, window_bounds = array<i64: 1, 32, 128>}, {transform_indices = @transform_2, window_bounds = array<i64: 1, 64, 32>}, {transform_indices = @transform_3, window_bounds = array<i64: 1, 32, 64>}, {transform_indices = @transform_4, window_bounds = array<i64: 1, 4, 32>}, {transform_indices = @transform_5, window_bounds = array<i64: 1, 5, 64, 128>}, {pipeline_mode = #tpu.pipeline_mode<synchronous>, transform_indices = @transform_6, window_bounds = array<i64: 5, 128, 128>}, {pipeline_mode = #tpu.pipeline_mode<synchronous>, transform_indices = @transform_7, window_bounds = array<i64: 5, 1, 128>}, {pipeline_mode = #tpu.pipeline_mode<synchronous>, transform_indices = @transform_8, window_bounds = array<i64: 5, 128, 128>}, {pipeline_mode = #tpu.pipeline_mode<synchronous>, transform_indices = @transform_9, window_bounds = array<i64: 5, 1, 128>}, {transform_indices = @transform_10, window_bounds = array<i64: 1, 4, 128>}]} {
    %c0 = arith.constant 0 : index
    %c0_0 = arith.constant 0 : index
    %c0_1 = arith.constant 0 : index
    %0 = vector.load %arg2[%c0, %c0_0, %c0_1] : memref<1x32x128xf32, #tpu.memory_space<vmem>>, vector<1x32x128xf32>
    %1 = vector.shape_cast %0 : vector<1x32x128xf32> to vector<32x128xf32>
    %c0_2 = arith.constant 0 : index
    %c0_3 = arith.constant 0 : index
    %c0_4 = arith.constant 0 : index
    %2 = vector.load %arg3[%c0_2, %c0_3, %c0_4] : memref<1x64x32xbf16, #tpu.memory_space<vmem>>, vector<1x64x32xbf16>
    %3 = vector.shape_cast %2 : vector<1x64x32xbf16> to vector<64x32xbf16>
    %c0_5 = arith.constant 0 : index
    %c0_6 = arith.constant 0 : index
    %c0_7 = arith.constant 0 : index
    %4 = vector.load %arg4[%c0_5, %c0_6, %c0_7] : memref<1x32x64xbf16, #tpu.memory_space<vmem>>, vector<1x32x64xbf16>
    %5 = vector.shape_cast %4 : vector<1x32x64xbf16> to vector<32x64xbf16>
    %c0_8 = arith.constant 0 : index
    %c0_9 = arith.constant 0 : index
    %c0_10 = arith.constant 0 : index
    %c0_11 = arith.constant 0 : index
    %6 = vector.load %arg6[%c0_8, %c0_9, %c0_10, %c0_11] : memref<1x5x64x128xf32, #tpu.memory_space<vmem>>, vector<1x1x64x128xf32>
    %7 = vector.shape_cast %6 : vector<1x1x64x128xf32> to vector<64x128xf32>
    %8 = arith.truncf %1 : vector<32x128xf32> to vector<32x128xbf16>
    %cst = arith.constant dense<0.000000e+00> : vector<64x128xf32>
    %9 = tpu.matmul %3, %8, %cst {dimension_numbers = #tpu.dot_dimension_numbers<[1], [0], [0], [1], [0, 0, 1, 1], [], []>} : vector<64x32xbf16>, vector<32x128xbf16>, vector<64x128xf32> -> vector<64x128xf32>
    %10 = arith.addf %9, %7 : vector<64x128xf32>
    %cst_12 = arith.constant 0.000000e+00 : f32
    %11 = vector.broadcast %cst_12 : f32 to vector<64x128xf32>
    %12 = arith.maximumf %10, %11 : vector<64x128xf32>
    %13 = arith.truncf %12 : vector<64x128xf32> to vector<64x128xbf16>
    %cst_13 = arith.constant dense<0.000000e+00> : vector<32x128xf32>
    %14 = tpu.matmul %5, %13, %cst_13 {dimension_numbers = #tpu.dot_dimension_numbers<[1], [0], [0], [1], [0, 0, 1, 1], [], []>} : vector<32x64xbf16>, vector<64x128xbf16>, vector<32x128xf32> -> vector<32x128xf32>
    %c0_14 = arith.constant 0 : index
    %15 = memref.load %arg1[%c0_14] : memref<5xf32, #tpu.memory_space<smem>>
    %16 = vector.broadcast %15 : f32 to vector<32x128xf32>
    %17 = arith.mulf %16, %1 : vector<32x128xf32>
    %18 = arith.addf %17, %14 : vector<32x128xf32>
    %c0_15 = arith.constant 0 : index
    %c0_16 = arith.constant 0 : index
    %c0_17 = arith.constant 0 : index
    %19 = vector.load %arg7[%c0_15, %c0_16, %c0_17] : memref<5x128x128xf32, #tpu.memory_space<vmem>>, vector<1x128x128xf32>
    %20 = vector.shape_cast %19 : vector<1x128x128xf32> to vector<128x128xf32>
    %cst_18 = arith.constant dense<0.000000e+00> : vector<32x128xf32>
    %21 = tpu.matmul %18, %20, %cst_18 {dimension_numbers = #tpu.dot_dimension_numbers<[1], [0], [0], [1], [0, 0, 1, 1], [], []>} : vector<32x128xf32>, vector<128x128xf32>, vector<32x128xf32> -> vector<32x128xf32>
    %c0_19 = arith.constant 0 : index
    %c0_20 = arith.constant 0 : index
    %c0_21 = arith.constant 0 : index
    %22 = vector.load %arg8[%c0_19, %c0_20, %c0_21] : memref<5x1x128xf32, #tpu.memory_space<vmem>>, vector<1x1x128xf32>
    %23 = vector.shape_cast %22 : vector<1x1x128xf32> to vector<1x128xf32>
    %24 = vector.broadcast %23 : vector<1x128xf32> to vector<32x128xf32>
    %25 = arith.addf %21, %24 : vector<32x128xf32>
    %cst_22 = arith.constant 0.000000e+00 : f32
    %26 = vector.broadcast %cst_22 : f32 to vector<32x128xf32>
    %27 = arith.maximumf %25, %26 : vector<32x128xf32>
    %c0_23 = arith.constant 0 : index
    %c0_24 = arith.constant 0 : index
    %c0_25 = arith.constant 0 : index
    %28 = vector.load %arg9[%c0_23, %c0_24, %c0_25] : memref<5x128x128xf32, #tpu.memory_space<vmem>>, vector<1x128x128xf32>
    %29 = vector.shape_cast %28 : vector<1x128x128xf32> to vector<128x128xf32>
    %cst_26 = arith.constant dense<0.000000e+00> : vector<32x128xf32>
    %30 = tpu.matmul %27, %29, %cst_26 {dimension_numbers = #tpu.dot_dimension_numbers<[1], [0], [0], [1], [0, 0, 1, 1], [], []>} : vector<32x128xf32>, vector<128x128xf32>, vector<32x128xf32> -> vector<32x128xf32>
    %c0_27 = arith.constant 0 : index
    %c0_28 = arith.constant 0 : index
    %c0_29 = arith.constant 0 : index
    %31 = vector.load %arg10[%c0_27, %c0_28, %c0_29] : memref<5x1x128xf32, #tpu.memory_space<vmem>>, vector<1x1x128xf32>
    %32 = vector.shape_cast %31 : vector<1x1x128xf32> to vector<1x128xf32>
    %33 = vector.broadcast %32 : vector<1x128xf32> to vector<32x128xf32>
    %34 = arith.addf %30, %33 : vector<32x128xf32>
    %cst_30 = arith.constant 0.000000e+00 : f32
    %35 = vector.broadcast %cst_30 : f32 to vector<32x128xf32>
    %36 = arith.maximumf %34, %35 : vector<32x128xf32>
    %c0_31 = arith.constant 0 : index
    %c1 = arith.constant 1 : index
    %c0_32 = arith.constant 0 : index
    %c0_33 = arith.constant 0 : index
    %37 = vector.load %arg6[%c0_31, %c1, %c0_32, %c0_33] : memref<1x5x64x128xf32, #tpu.memory_space<vmem>>, vector<1x1x64x128xf32>
    %38 = vector.shape_cast %37 : vector<1x1x64x128xf32> to vector<64x128xf32>
    %39 = arith.truncf %36 : vector<32x128xf32> to vector<32x128xbf16>
    %cst_34 = arith.constant dense<0.000000e+00> : vector<64x128xf32>
    %40 = tpu.matmul %3, %39, %cst_34 {dimension_numbers = #tpu.dot_dimension_numbers<[1], [0], [0], [1], [0, 0, 1, 1], [], []>} : vector<64x32xbf16>, vector<32x128xbf16>, vector<64x128xf32> -> vector<64x128xf32>
    %41 = arith.addf %40, %38 : vector<64x128xf32>
    %cst_35 = arith.constant 0.000000e+00 : f32
    %42 = vector.broadcast %cst_35 : f32 to vector<64x128xf32>
    %43 = arith.maximumf %41, %42 : vector<64x128xf32>
    %44 = arith.truncf %43 : vector<64x128xf32> to vector<64x128xbf16>
    %cst_36 = arith.constant dense<0.000000e+00> : vector<32x128xf32>
    %45 = tpu.matmul %5, %44, %cst_36 {dimension_numbers = #tpu.dot_dimension_numbers<[1], [0], [0], [1], [0, 0, 1, 1], [], []>} : vector<32x64xbf16>, vector<64x128xbf16>, vector<32x128xf32> -> vector<32x128xf32>
    %c1_37 = arith.constant 1 : index
    %46 = memref.load %arg1[%c1_37] : memref<5xf32, #tpu.memory_space<smem>>
    %47 = vector.broadcast %46 : f32 to vector<32x128xf32>
    %48 = arith.mulf %47, %36 : vector<32x128xf32>
    %49 = arith.addf %48, %45 : vector<32x128xf32>
    %c1_38 = arith.constant 1 : index
    %c0_39 = arith.constant 0 : index
    %c0_40 = arith.constant 0 : index
    %50 = vector.load %arg7[%c1_38, %c0_39, %c0_40] : memref<5x128x128xf32, #tpu.memory_space<vmem>>, vector<1x128x128xf32>
    %51 = vector.shape_cast %50 : vector<1x128x128xf32> to vector<128x128xf32>
    %cst_41 = arith.constant dense<0.000000e+00> : vector<32x128xf32>
    %52 = tpu.matmul %49, %51, %cst_41 {dimension_numbers = #tpu.dot_dimension_numbers<[1], [0], [0], [1], [0, 0, 1, 1], [], []>} : vector<32x128xf32>, vector<128x128xf32>, vector<32x128xf32> -> vector<32x128xf32>
    %c1_42 = arith.constant 1 : index
    %c0_43 = arith.constant 0 : index
    %c0_44 = arith.constant 0 : index
    %53 = vector.load %arg8[%c1_42, %c0_43, %c0_44] : memref<5x1x128xf32, #tpu.memory_space<vmem>>, vector<1x1x128xf32>
    %54 = vector.shape_cast %53 : vector<1x1x128xf32> to vector<1x128xf32>
    %55 = vector.broadcast %54 : vector<1x128xf32> to vector<32x128xf32>
    %56 = arith.addf %52, %55 : vector<32x128xf32>
    %cst_45 = arith.constant 0.000000e+00 : f32
    %57 = vector.broadcast %cst_45 : f32 to vector<32x128xf32>
    %58 = arith.maximumf %56, %57 : vector<32x128xf32>
    %c1_46 = arith.constant 1 : index
    %c0_47 = arith.constant 0 : index
    %c0_48 = arith.constant 0 : index
    %59 = vector.load %arg9[%c1_46, %c0_47, %c0_48] : memref<5x128x128xf32, #tpu.memory_space<vmem>>, vector<1x128x128xf32>
    %60 = vector.shape_cast %59 : vector<1x128x128xf32> to vector<128x128xf32>
    %cst_49 = arith.constant dense<0.000000e+00> : vector<32x128xf32>
    %61 = tpu.matmul %58, %60, %cst_49 {dimension_numbers = #tpu.dot_dimension_numbers<[1], [0], [0], [1], [0, 0, 1, 1], [], []>} : vector<32x128xf32>, vector<128x128xf32>, vector<32x128xf32> -> vector<32x128xf32>
    %c1_50 = arith.constant 1 : index
    %c0_51 = arith.constant 0 : index
    %c0_52 = arith.constant 0 : index
    %62 = vector.load %arg10[%c1_50, %c0_51, %c0_52] : memref<5x1x128xf32, #tpu.memory_space<vmem>>, vector<1x1x128xf32>
    %63 = vector.shape_cast %62 : vector<1x1x128xf32> to vector<1x128xf32>
    %64 = vector.broadcast %63 : vector<1x128xf32> to vector<32x128xf32>
    %65 = arith.addf %61, %64 : vector<32x128xf32>
    %cst_53 = arith.constant 0.000000e+00 : f32
    %66 = vector.broadcast %cst_53 : f32 to vector<32x128xf32>
    %67 = arith.maximumf %65, %66 : vector<32x128xf32>
    %c0_54 = arith.constant 0 : index
    %c2 = arith.constant 2 : index
    %c0_55 = arith.constant 0 : index
    %c0_56 = arith.constant 0 : index
    %68 = vector.load %arg6[%c0_54, %c2, %c0_55, %c0_56] : memref<1x5x64x128xf32, #tpu.memory_space<vmem>>, vector<1x1x64x128xf32>
    %69 = vector.shape_cast %68 : vector<1x1x64x128xf32> to vector<64x128xf32>
    %70 = arith.truncf %67 : vector<32x128xf32> to vector<32x128xbf16>
    %cst_57 = arith.constant dense<0.000000e+00> : vector<64x128xf32>
    %71 = tpu.matmul %3, %70, %cst_57 {dimension_numbers = #tpu.dot_dimension_numbers<[1], [0], [0], [1], [0, 0, 1, 1], [], []>} : vector<64x32xbf16>, vector<32x128xbf16>, vector<64x128xf32> -> vector<64x128xf32>
    %72 = arith.addf %71, %69 : vector<64x128xf32>
    %cst_58 = arith.constant 0.000000e+00 : f32
    %73 = vector.broadcast %cst_58 : f32 to vector<64x128xf32>
    %74 = arith.maximumf %72, %73 : vector<64x128xf32>
    %75 = arith.truncf %74 : vector<64x128xf32> to vector<64x128xbf16>
    %cst_59 = arith.constant dense<0.000000e+00> : vector<32x128xf32>
    %76 = tpu.matmul %5, %75, %cst_59 {dimension_numbers = #tpu.dot_dimension_numbers<[1], [0], [0], [1], [0, 0, 1, 1], [], []>} : vector<32x64xbf16>, vector<64x128xbf16>, vector<32x128xf32> -> vector<32x128xf32>
    %c2_60 = arith.constant 2 : index
    %77 = memref.load %arg1[%c2_60] : memref<5xf32, #tpu.memory_space<smem>>
    %78 = vector.broadcast %77 : f32 to vector<32x128xf32>
    %79 = arith.mulf %78, %67 : vector<32x128xf32>
    %80 = arith.addf %79, %76 : vector<32x128xf32>
    %c2_61 = arith.constant 2 : index
    %c0_62 = arith.constant 0 : index
    %c0_63 = arith.constant 0 : index
    %81 = vector.load %arg7[%c2_61, %c0_62, %c0_63] : memref<5x128x128xf32, #tpu.memory_space<vmem>>, vector<1x128x128xf32>
    %82 = vector.shape_cast %81 : vector<1x128x128xf32> to vector<128x128xf32>
    %cst_64 = arith.constant dense<0.000000e+00> : vector<32x128xf32>
    %83 = tpu.matmul %80, %82, %cst_64 {dimension_numbers = #tpu.dot_dimension_numbers<[1], [0], [0], [1], [0, 0, 1, 1], [], []>} : vector<32x128xf32>, vector<128x128xf32>, vector<32x128xf32> -> vector<32x128xf32>
    %c2_65 = arith.constant 2 : index
    %c0_66 = arith.constant 0 : index
    %c0_67 = arith.constant 0 : index
    %84 = vector.load %arg8[%c2_65, %c0_66, %c0_67] : memref<5x1x128xf32, #tpu.memory_space<vmem>>, vector<1x1x128xf32>
    %85 = vector.shape_cast %84 : vector<1x1x128xf32> to vector<1x128xf32>
    %86 = vector.broadcast %85 : vector<1x128xf32> to vector<32x128xf32>
    %87 = arith.addf %83, %86 : vector<32x128xf32>
    %cst_68 = arith.constant 0.000000e+00 : f32
    %88 = vector.broadcast %cst_68 : f32 to vector<32x128xf32>
    %89 = arith.maximumf %87, %88 : vector<32x128xf32>
    %c2_69 = arith.constant 2 : index
    %c0_70 = arith.constant 0 : index
    %c0_71 = arith.constant 0 : index
    %90 = vector.load %arg9[%c2_69, %c0_70, %c0_71] : memref<5x128x128xf32, #tpu.memory_space<vmem>>, vector<1x128x128xf32>
    %91 = vector.shape_cast %90 : vector<1x128x128xf32> to vector<128x128xf32>
    %cst_72 = arith.constant dense<0.000000e+00> : vector<32x128xf32>
    %92 = tpu.matmul %89, %91, %cst_72 {dimension_numbers = #tpu.dot_dimension_numbers<[1], [0], [0], [1], [0, 0, 1, 1], [], []>} : vector<32x128xf32>, vector<128x128xf32>, vector<32x128xf32> -> vector<32x128xf32>
    %c2_73 = arith.constant 2 : index
    %c0_74 = arith.constant 0 : index
    %c0_75 = arith.constant 0 : index
    %93 = vector.load %arg10[%c2_73, %c0_74, %c0_75] : memref<5x1x128xf32, #tpu.memory_space<vmem>>, vector<1x1x128xf32>
    %94 = vector.shape_cast %93 : vector<1x1x128xf32> to vector<1x128xf32>
    %95 = vector.broadcast %94 : vector<1x128xf32> to vector<32x128xf32>
    %96 = arith.addf %92, %95 : vector<32x128xf32>
    %cst_76 = arith.constant 0.000000e+00 : f32
    %97 = vector.broadcast %cst_76 : f32 to vector<32x128xf32>
    %98 = arith.maximumf %96, %97 : vector<32x128xf32>
    %c0_77 = arith.constant 0 : index
    %c3 = arith.constant 3 : index
    %c0_78 = arith.constant 0 : index
    %c0_79 = arith.constant 0 : index
    %99 = vector.load %arg6[%c0_77, %c3, %c0_78, %c0_79] : memref<1x5x64x128xf32, #tpu.memory_space<vmem>>, vector<1x1x64x128xf32>
    %100 = vector.shape_cast %99 : vector<1x1x64x128xf32> to vector<64x128xf32>
    %101 = arith.truncf %98 : vector<32x128xf32> to vector<32x128xbf16>
    %cst_80 = arith.constant dense<0.000000e+00> : vector<64x128xf32>
    %102 = tpu.matmul %3, %101, %cst_80 {dimension_numbers = #tpu.dot_dimension_numbers<[1], [0], [0], [1], [0, 0, 1, 1], [], []>} : vector<64x32xbf16>, vector<32x128xbf16>, vector<64x128xf32> -> vector<64x128xf32>
    %103 = arith.addf %102, %100 : vector<64x128xf32>
    %cst_81 = arith.constant 0.000000e+00 : f32
    %104 = vector.broadcast %cst_81 : f32 to vector<64x128xf32>
    %105 = arith.maximumf %103, %104 : vector<64x128xf32>
    %106 = arith.truncf %105 : vector<64x128xf32> to vector<64x128xbf16>
    %cst_82 = arith.constant dense<0.000000e+00> : vector<32x128xf32>
    %107 = tpu.matmul %5, %106, %cst_82 {dimension_numbers = #tpu.dot_dimension_numbers<[1], [0], [0], [1], [0, 0, 1, 1], [], []>} : vector<32x64xbf16>, vector<64x128xbf16>, vector<32x128xf32> -> vector<32x128xf32>
    %c3_83 = arith.constant 3 : index
    %108 = memref.load %arg1[%c3_83] : memref<5xf32, #tpu.memory_space<smem>>
    %109 = vector.broadcast %108 : f32 to vector<32x128xf32>
    %110 = arith.mulf %109, %98 : vector<32x128xf32>
    %111 = arith.addf %110, %107 : vector<32x128xf32>
    %c3_84 = arith.constant 3 : index
    %c0_85 = arith.constant 0 : index
    %c0_86 = arith.constant 0 : index
    %112 = vector.load %arg7[%c3_84, %c0_85, %c0_86] : memref<5x128x128xf32, #tpu.memory_space<vmem>>, vector<1x128x128xf32>
    %113 = vector.shape_cast %112 : vector<1x128x128xf32> to vector<128x128xf32>
    %cst_87 = arith.constant dense<0.000000e+00> : vector<32x128xf32>
    %114 = tpu.matmul %111, %113, %cst_87 {dimension_numbers = #tpu.dot_dimension_numbers<[1], [0], [0], [1], [0, 0, 1, 1], [], []>} : vector<32x128xf32>, vector<128x128xf32>, vector<32x128xf32> -> vector<32x128xf32>
    %c3_88 = arith.constant 3 : index
    %c0_89 = arith.constant 0 : index
    %c0_90 = arith.constant 0 : index
    %115 = vector.load %arg8[%c3_88, %c0_89, %c0_90] : memref<5x1x128xf32, #tpu.memory_space<vmem>>, vector<1x1x128xf32>
    %116 = vector.shape_cast %115 : vector<1x1x128xf32> to vector<1x128xf32>
    %117 = vector.broadcast %116 : vector<1x128xf32> to vector<32x128xf32>
    %118 = arith.addf %114, %117 : vector<32x128xf32>
    %cst_91 = arith.constant 0.000000e+00 : f32
    %119 = vector.broadcast %cst_91 : f32 to vector<32x128xf32>
    %120 = arith.maximumf %118, %119 : vector<32x128xf32>
    %c3_92 = arith.constant 3 : index
    %c0_93 = arith.constant 0 : index
    %c0_94 = arith.constant 0 : index
    %121 = vector.load %arg9[%c3_92, %c0_93, %c0_94] : memref<5x128x128xf32, #tpu.memory_space<vmem>>, vector<1x128x128xf32>
    %122 = vector.shape_cast %121 : vector<1x128x128xf32> to vector<128x128xf32>
    %cst_95 = arith.constant dense<0.000000e+00> : vector<32x128xf32>
    %123 = tpu.matmul %120, %122, %cst_95 {dimension_numbers = #tpu.dot_dimension_numbers<[1], [0], [0], [1], [0, 0, 1, 1], [], []>} : vector<32x128xf32>, vector<128x128xf32>, vector<32x128xf32> -> vector<32x128xf32>
    %c3_96 = arith.constant 3 : index
    %c0_97 = arith.constant 0 : index
    %c0_98 = arith.constant 0 : index
    %124 = vector.load %arg10[%c3_96, %c0_97, %c0_98] : memref<5x1x128xf32, #tpu.memory_space<vmem>>, vector<1x1x128xf32>
    %125 = vector.shape_cast %124 : vector<1x1x128xf32> to vector<1x128xf32>
    %126 = vector.broadcast %125 : vector<1x128xf32> to vector<32x128xf32>
    %127 = arith.addf %123, %126 : vector<32x128xf32>
    %cst_99 = arith.constant 0.000000e+00 : f32
    %128 = vector.broadcast %cst_99 : f32 to vector<32x128xf32>
    %129 = arith.maximumf %127, %128 : vector<32x128xf32>
    %c0_100 = arith.constant 0 : index
    %c4 = arith.constant 4 : index
    %c0_101 = arith.constant 0 : index
    %c0_102 = arith.constant 0 : index
    %130 = vector.load %arg6[%c0_100, %c4, %c0_101, %c0_102] : memref<1x5x64x128xf32, #tpu.memory_space<vmem>>, vector<1x1x64x128xf32>
    %131 = vector.shape_cast %130 : vector<1x1x64x128xf32> to vector<64x128xf32>
    %132 = arith.truncf %129 : vector<32x128xf32> to vector<32x128xbf16>
    %cst_103 = arith.constant dense<0.000000e+00> : vector<64x128xf32>
    %133 = tpu.matmul %3, %132, %cst_103 {dimension_numbers = #tpu.dot_dimension_numbers<[1], [0], [0], [1], [0, 0, 1, 1], [], []>} : vector<64x32xbf16>, vector<32x128xbf16>, vector<64x128xf32> -> vector<64x128xf32>
    %134 = arith.addf %133, %131 : vector<64x128xf32>
    %cst_104 = arith.constant 0.000000e+00 : f32
    %135 = vector.broadcast %cst_104 : f32 to vector<64x128xf32>
    %136 = arith.maximumf %134, %135 : vector<64x128xf32>
    %137 = arith.truncf %136 : vector<64x128xf32> to vector<64x128xbf16>
    %cst_105 = arith.constant dense<0.000000e+00> : vector<32x128xf32>
    %138 = tpu.matmul %5, %137, %cst_105 {dimension_numbers = #tpu.dot_dimension_numbers<[1], [0], [0], [1], [0, 0, 1, 1], [], []>} : vector<32x64xbf16>, vector<64x128xbf16>, vector<32x128xf32> -> vector<32x128xf32>
    %c4_106 = arith.constant 4 : index
    %139 = memref.load %arg1[%c4_106] : memref<5xf32, #tpu.memory_space<smem>>
    %140 = vector.broadcast %139 : f32 to vector<32x128xf32>
    %141 = arith.mulf %140, %129 : vector<32x128xf32>
    %142 = arith.addf %141, %138 : vector<32x128xf32>
    %c4_107 = arith.constant 4 : index
    %c0_108 = arith.constant 0 : index
    %c0_109 = arith.constant 0 : index
    %143 = vector.load %arg7[%c4_107, %c0_108, %c0_109] : memref<5x128x128xf32, #tpu.memory_space<vmem>>, vector<1x128x128xf32>
    %144 = vector.shape_cast %143 : vector<1x128x128xf32> to vector<128x128xf32>
    %cst_110 = arith.constant dense<0.000000e+00> : vector<32x128xf32>
    %145 = tpu.matmul %142, %144, %cst_110 {dimension_numbers = #tpu.dot_dimension_numbers<[1], [0], [0], [1], [0, 0, 1, 1], [], []>} : vector<32x128xf32>, vector<128x128xf32>, vector<32x128xf32> -> vector<32x128xf32>
    %c4_111 = arith.constant 4 : index
    %c0_112 = arith.constant 0 : index
    %c0_113 = arith.constant 0 : index
    %146 = vector.load %arg8[%c4_111, %c0_112, %c0_113] : memref<5x1x128xf32, #tpu.memory_space<vmem>>, vector<1x1x128xf32>
    %147 = vector.shape_cast %146 : vector<1x1x128xf32> to vector<1x128xf32>
    %148 = vector.broadcast %147 : vector<1x128xf32> to vector<32x128xf32>
    %149 = arith.addf %145, %148 : vector<32x128xf32>
    %cst_114 = arith.constant 0.000000e+00 : f32
    %150 = vector.broadcast %cst_114 : f32 to vector<32x128xf32>
    %151 = arith.maximumf %149, %150 : vector<32x128xf32>
    %c4_115 = arith.constant 4 : index
    %c0_116 = arith.constant 0 : index
    %c0_117 = arith.constant 0 : index
    %152 = vector.load %arg9[%c4_115, %c0_116, %c0_117] : memref<5x128x128xf32, #tpu.memory_space<vmem>>, vector<1x128x128xf32>
    %153 = vector.shape_cast %152 : vector<1x128x128xf32> to vector<128x128xf32>
    %cst_118 = arith.constant dense<0.000000e+00> : vector<32x128xf32>
    %154 = tpu.matmul %151, %153, %cst_118 {dimension_numbers = #tpu.dot_dimension_numbers<[1], [0], [0], [1], [0, 0, 1, 1], [], []>} : vector<32x128xf32>, vector<128x128xf32>, vector<32x128xf32> -> vector<32x128xf32>
    %c4_119 = arith.constant 4 : index
    %c0_120 = arith.constant 0 : index
    %c0_121 = arith.constant 0 : index
    %155 = vector.load %arg10[%c4_119, %c0_120, %c0_121] : memref<5x1x128xf32, #tpu.memory_space<vmem>>, vector<1x1x128xf32>
    %156 = vector.shape_cast %155 : vector<1x1x128xf32> to vector<1x128xf32>
    %157 = vector.broadcast %156 : vector<1x128xf32> to vector<32x128xf32>
    %158 = arith.addf %154, %157 : vector<32x128xf32>
    %cst_122 = arith.constant 0.000000e+00 : f32
    %159 = vector.broadcast %cst_122 : f32 to vector<32x128xf32>
    %160 = arith.maximumf %158, %159 : vector<32x128xf32>
    %c0_123 = arith.constant 0 : index
    %c0_124 = arith.constant 0 : index
    %c0_125 = arith.constant 0 : index
    %161 = vector.load %arg5[%c0_123, %c0_124, %c0_125] : memref<1x4x32xf32, #tpu.memory_space<vmem>>, vector<1x4x32xf32>
    %162 = vector.shape_cast %161 : vector<1x4x32xf32> to vector<4x32xf32>
    %cst_126 = arith.constant dense<0.000000e+00> : vector<4x128xf32>
    %163 = tpu.matmul %162, %160, %cst_126 {dimension_numbers = #tpu.dot_dimension_numbers<[1], [0], [0], [1], [0, 0, 1, 1], [], []>} : vector<4x32xf32>, vector<32x128xf32>, vector<4x128xf32> -> vector<4x128xf32>
    %c0_127 = arith.constant 0 : index
    %c0_128 = arith.constant 0 : index
    %c0_129 = arith.constant 0 : index
    %164 = vector.load %arg11[%c0_127, %c0_128, %c0_129] : memref<1x4x128xf32, #tpu.memory_space<vmem>>, vector<1x4x128xf32>
    %165 = vector.shape_cast %164 : vector<1x4x128xf32> to vector<4x128xf32>
    %166 = vector.shape_cast %163 : vector<4x128xf32> to vector<1x4x128xf32>
    tpu.vector_store %arg11[%c0_127, %c0_128, %c0_129], %166 {strides = array<i32>} : memref<1x4x128xf32, #tpu.memory_space<vmem>>, vector<1x4x128xf32>,
    return
  }
  func.func @transform_0(%arg0: i32) -> i32 {
    %c0_i32 = arith.constant 0 : i32
    %c0_i32_0 = arith.constant 0 : i32
    return %c0_i32 : i32
  }
  func.func @transform_1(%arg0: i32) -> (i32, i32, i32) {
    %c0_i32 = arith.constant 0 : i32
    %c0_i32_0 = arith.constant 0 : i32
    %c0_i32_1 = arith.constant 0 : i32
    return %arg0, %c0_i32, %c0_i32_0 : i32, i32, i32
  }
  func.func @transform_2(%arg0: i32) -> (i32, i32, i32) {
    %c0_i32 = arith.constant 0 : i32
    %c0_i32_0 = arith.constant 0 : i32
    %c0_i32_1 = arith.constant 0 : i32
    return %arg0, %c0_i32, %c0_i32_0 : i32, i32, i32
  }
  func.func @transform_3(%arg0: i32) -> (i32, i32, i32) {
    %c0_i32 = arith.constant 0 : i32
    %c0_i32_0 = arith.constant 0 : i32
    %c0_i32_1 = arith.constant 0 : i32
    return %arg0, %c0_i32, %c0_i32_0 : i32, i32, i32
  }
  func.func @transform_4(%arg0: i32) -> (i32, i32, i32) {
    %c0_i32 = arith.constant 0 : i32
    %c0_i32_0 = arith.constant 0 : i32
    %c0_i32_1 = arith.constant 0 : i32
    return %arg0, %c0_i32, %c0_i32_0 : i32, i32, i32
  }
  func.func @transform_5(%arg0: i32) -> (i32, i32, i32, i32) {
    %c0_i32 = arith.constant 0 : i32
    %c0_i32_0 = arith.constant 0 : i32
    %c0_i32_1 = arith.constant 0 : i32
    %c0_i32_2 = arith.constant 0 : i32
    return %arg0, %c0_i32, %c0_i32_0, %c0_i32_1 : i32, i32, i32, i32
  }
  func.func @transform_6(%arg0: i32) -> (i32, i32, i32) {
    %c0_i32 = arith.constant 0 : i32
    %c0_i32_0 = arith.constant 0 : i32
    %c0_i32_1 = arith.constant 0 : i32
    %c0_i32_2 = arith.constant 0 : i32
    return %c0_i32, %c0_i32_0, %c0_i32_1 : i32, i32, i32
  }
  func.func @transform_7(%arg0: i32) -> (i32, i32, i32) {
    %c0_i32 = arith.constant 0 : i32
    %c0_i32_0 = arith.constant 0 : i32
    %c0_i32_1 = arith.constant 0 : i32
    %c0_i32_2 = arith.constant 0 : i32
    return %c0_i32, %c0_i32_0, %c0_i32_1 : i32, i32, i32
  }
  func.func @transform_8(%arg0: i32) -> (i32, i32, i32) {
    %c0_i32 = arith.constant 0 : i32
    %c0_i32_0 = arith.constant 0 : i32
    %c0_i32_1 = arith.constant 0 : i32
    %c0_i32_2 = arith.constant 0 : i32
    return %c0_i32, %c0_i32_0, %c0_i32_1 : i32, i32, i32
  }
  func.func @transform_9(%arg0: i32) -> (i32, i32, i32) {
    %c0_i32 = arith.constant 0 : i32
    %c0_i32_0 = arith.constant 0 : i32
    %c0_i32_1 = arith.constant 0 : i32
    %c0_i32_2 = arith.constant 0 : i32
    return %c0_i32, %c0_i32_0, %c0_i32_1 : i32, i32, i32
  }
  func.func @transform_10(%arg0: i32) -> (i32, i32, i32) {
    %c0_i32 = arith.constant 0 : i32
    %c0_i32_0 = arith.constant 0 : i32
    %c0_i32_1 = arith.constant 0 : i32
    return %arg0, %c0_i32, %c0_i32_0 : i32, i32, i32
  }
}

</mosaic_0001>

<llo_original>
// kernel: gine_forward.1
$region0: #{gine_forward.1}
  #allocation0 [shape = 'u32[]', space=smem, size = 0x4, offset = 0x4, fixed_abs, tag = 'smem constant byte address 0x4 - core index']
  #allocation1 [shape = 'u32[144,128]{1,0:T(1,128)}', space=vmem, size = 0x12000, scoped, tag = 'internal scratch']
  %s0 = inlined_call_operand.vmem [shape: f32[5], index: 0, kind: input, shape index: {}]
  %s1 = inlined_call_operand.vmem [shape: f32[2,32,128], index: 1, kind: input, shape index: {}]
  %s2 = inlined_call_operand.vmem [shape: bf16[2,64,32], index: 2, kind: input, shape index: {}]
  %s3 = inlined_call_operand.vmem [shape: bf16[2,32,64], index: 3, kind: input, shape index: {}]
  %s4 = inlined_call_operand.vmem [shape: f32[2,4,32], index: 4, kind: input, shape index: {}]
  %s5 = inlined_call_operand.vmem [shape: f32[2,5,64,128], index: 5, kind: input, shape index: {}]
  %s6 = inlined_call_operand.vmem [shape: f32[5,128,128], index: 6, kind: input, shape index: {}]
  %s7 = inlined_call_operand.vmem [shape: f32[5,1,128], index: 7, kind: input, shape index: {}]
  %s8 = inlined_call_operand.hbm [shape: f32[5,128,128], index: 8, kind: input, shape index: {}]
  %s9 = inlined_call_operand.vmem [shape: f32[5,1,128], index: 9, kind: input, shape index: {}]
  %s10 = inlined_call_operand.vmem [shape: f32[2,4,128], index: 10, kind: output, shape index: {}]
  %s11 = sld [smem:[#allocation0]]
  $region81: #{gine_forward.1} parent=0
    _
  %s13 = ssub.s32 1, %s11
  %s14 = scalar_select 0, %s13, %s11
  $region1: #{gine_forward.1} parent=0
    #allocation2 [shape = 'u8[512]{0}', space=smem, size = 0x200, scoped, tag = 'input window, operand 0, single buffered']
    #allocation3 [shape = 's32[2]{0}', space=sflag, size = 0x8, scoped, tag = 'scoped memory for gine_forward.1']
    #allocation4 [shape = 's32[2]{0}', space=sflag, size = 0x8, scoped, tag = 'scoped memory for gine_forward.1']
    #allocation5 [shape = 'u8[327680]{0}', space=vmem, size = 0x50000, scoped, tag = 'input window, operand 8, single buffered']
    %15 = vsyncpa [#allocation4], 0
    %16 = vsyncpa [#allocation3], 0
    loop: start=0, step=1, limit=4
    $region2: #{gine_forward.1} parent=1 // loop_pre_header
      _
    $region3: #{gine_forward.1} parent=1 // loop_header
      %s18 = sphi 0, %s22
      %p19 = scmp.ge.s32.totalorder %s18, 4
      %s26 = sphi 0, %s26
      %s28 = sphi 0, %s26
      %s29 = sphi 0, %s28
      %s43 = sphi 0, %s29
      %s49 = sphi 0, %s51
      %s52 = sphi 0, %s49
      %s53 = sphi 0, %s52
      %s69 = sphi 0, %s53
      %s75 = sphi 0, %s77
      %s78 = sphi 0, %s75
      %s79 = sphi 0, %s78
      %s95 = sphi 0, %s79
      %s101 = sphi 0, %s103
      %s104 = sphi 0, %s101
      %s105 = sphi 0, %s104
      %s121 = sphi 0, %s105
      %s127 = sphi 0, %s129
      %s130 = sphi 0, %s127
      %s131 = sphi 0, %s130
      %s147 = sphi 0, %s131
      %s153 = sphi 0, %s155
      %s156 = sphi 0, %s153
      %s157 = sphi 0, %s156
      %s173 = sphi 0, %s157
      %s177 = sphi 0, %s177
      %s179 = sphi 0, %s177
      %s180 = sphi 0, %s179
      %s194 = sphi 0, %s180
      %s198 = sphi 0, %s198
      %s200 = sphi 0, %s198
      %s201 = sphi 0, %s200
      %s215 = sphi 0, %s201
      %s219 = sphi 0, %s219
      %s221 = sphi 0, %s219
      %s222 = sphi 0, %s221
      %s236 = sphi 0, %s222
      %s240 = sphi 0, %s240
      %s242 = sphi 0, %s240
      %s243 = sphi 0, %s242
      %s257 = sphi 0, %s243
      %s263 = sphi 0, %s265
      %s266 = sphi 0, %s263
      %s267 = sphi 0, %s266
      %s283 = sphi 0, %s267
    $region4: #{gine_forward.1} parent=1 // loop_header_branch
      %21 = sbr.rel (%p19) target = $region8
    $region5: #{gine_forward.1} parent=1 // loop_body
      %s23 = ssub.s32 %s18, 1
      %s24 = ssub.s32 %s18, 2
      %s25 = sadd.s32 %s18, 1
      %s27 = sadd.s32 %s26, 1
      %p30 = scmp.eq.s32.totalorder %s18, 1
      %p31 = scmp.ne.s32.totalorder %s26, %s28
      %p32 = scmp.eq.s32.totalorder %s18, 0
      %p33 = por %p31, %p32
      %p34 = scmp.ne.s32.totalorder %s26, %s28
      %p35 = scmp.eq.s32.totalorder %s23, 1
      %p36 = por %p34, %p35
      %p37 = scmp.ne.s32.totalorder %s28, %s29
      %p38 = scmp.eq.s32.totalorder %s23, 0
      %p39 = por %p37, %p38
      %p40 = scmp.ne.s32.totalorder %s28, %s29
      %p41 = scmp.eq.s32.totalorder %s24, 1
      %p42 = por %p40, %p41
      %p44 = scmp.ne.s32.totalorder %s29, %s43
      %p45 = scmp.eq.s32.totalorder %s24, 0
      %p46 = por %p44, %p45
      %s47 = ssub.s32 %s18, %s25
      %p48 = scmp.eq.s32.totalorder %s47, 0
      %s50 = sadd.s32 %s49, 1
      %s51 = scalar_select %p48, %s49, %s50
      %p54 = pneg %p48
      %p55 = scmp.eq.s32.totalorder %s18, 1
      %p56 = por %p54, %p55
      %p57 = scmp.ne.s32.totalorder %s49, %s52
      %p58 = scmp.eq.s32.totalorder %s18, 0
      %p59 = por %p57, %p58
      %p60 = scmp.ne.s32.totalorder %s49, %s52
      %p61 = scmp.eq.s32.totalorder %s23, 1
      %p62 = por %p60, %p61
      %p63 = scmp.ne.s32.totalorder %s52, %s53
      %p64 = scmp.eq.s32.totalorder %s23, 0
      %p65 = por %p63, %p64
      %p66 = scmp.ne.s32.totalorder %s52, %s53
      %p67 = scmp.eq.s32.totalorder %s24, 1
      %p68 = por %p66, %p67
      %p70 = scmp.ne.s32.totalorder %s53, %s69
      %p71 = scmp.eq.s32.totalorder %s24, 0
      %p72 = por %p70, %p71
      %s73 = ssub.s32 %s18, %s25
      %p74 = scmp.eq.s32.totalorder %s73, 0
      %s76 = sadd.s32 %s75, 1
      %s77 = scalar_select %p74, %s75, %s76
      %p80 = pneg %p74
      %p81 = scmp.eq.s32.totalorder %s18, 1
      %p82 = por %p80, %p81
      %p83 = scmp.ne.s32.totalorder %s75, %s78
      %p84 = scmp.eq.s32.totalorder %s18, 0
      %p85 = por %p83, %p84
      %p86 = scmp.ne.s32.totalorder %s75, %s78
      %p87 = scmp.eq.s32.totalorder %s23, 1
      %p88 = por %p86, %p87
      %p89 = scmp.ne.s32.totalorder %s78, %s79
      %p90 = scmp.eq.s32.totalorder %s23, 0
      %p91 = por %p89, %p90
      %p92 = scmp.ne.s32.totalorder %s78, %s79
      %p93 = scmp.eq.s32.totalorder %s24, 1
      %p94 = por %p92, %p93
      %p96 = scmp.ne.s32.totalorder %s79, %s95
      %p97 = scmp.eq.s32.totalorder %s24, 0
      %p98 = por %p96, %p97
      %s99 = ssub.s32 %s18, %s25
      %p100 = scmp.eq.s32.totalorder %s99, 0
      %s102 = sadd.s32 %s101, 1
      %s103 = scalar_select %p100, %s101, %s102
      %p106 = pneg %p100
      %p107 = scmp.eq.s32.totalorder %s18, 1
      %p108 = por %p106, %p107
      %p109 = scmp.ne.s32.totalorder %s101, %s104
      %p110 = scmp.eq.s32.totalorder %s18, 0
      %p111 = por %p109, %p110
      %p112 = scmp.ne.s32.totalorder %s101, %s104
      %p113 = scmp.eq.s32.totalorder %s23, 1
      %p114 = por %p112, %p113
      %p115 = scmp.ne.s32.totalorder %s104, %s105
      %p116 = scmp.eq.s32.totalorder %s23, 0
      %p117 = por %p115, %p116
      %p118 = scmp.ne.s32.totalorder %s104, %s105
      %p119 = scmp.eq.s32.totalorder %s24, 1
      %p120 = por %p118, %p119
      %p122 = scmp.ne.s32.totalorder %s105, %s121
      %p123 = scmp.eq.s32.totalorder %s24, 0
      %p124 = por %p122, %p123
      %s125 = ssub.s32 %s18, %s25
      %p126 = scmp.eq.s32.totalorder %s125, 0
      %s128 = sadd.s32 %s127, 1
      %s129 = scalar_select %p126, %s127, %s128
      %p132 = pneg %p126
      %p133 = scmp.eq.s32.totalorder %s18, 1
      %p134 = por %p132, %p133
      %p135 = scmp.ne.s32.totalorder %s127, %s130
      %p136 = scmp.eq.s32.totalorder %s18, 0
      %p137 = por %p135, %p136
      %p138 = scmp.ne.s32.totalorder %s127, %s130
      %p139 = scmp.eq.s32.totalorder %s23, 1
      %p140 = por %p138, %p139
      %p141 = scmp.ne.s32.totalorder %s130, %s131
      %p142 = scmp.eq.s32.totalorder %s23, 0
      %p143 = por %p141, %p142
      %p144 = scmp.ne.s32.totalorder %s130, %s131
      %p145 = scmp.eq.s32.totalorder %s24, 1
      %p146 = por %p144, %p145
      %p148 = scmp.ne.s32.totalorder %s131, %s147
      %p149 = scmp.eq.s32.totalorder %s24, 0
      %p150 = por %p148, %p149
      %s151 = ssub.s32 %s18, %s25
      %p152 = scmp.eq.s32.totalorder %s151, 0
      %s154 = sadd.s32 %s153, 1
      %s155 = scalar_select %p152, %s153, %s154
      %p158 = pneg %p152
      %p159 = scmp.eq.s32.totalorder %s18, 1
      %p160 = por %p158, %p159
      %p161 = scmp.ne.s32.totalorder %s153, %s156
      %p162 = scmp.eq.s32.totalorder %s18, 0
      %p163 = por %p161, %p162
      %p164 = scmp.ne.s32.totalorder %s153, %s156
      %p165 = scmp.eq.s32.totalorder %s23, 1
      %p166 = por %p164, %p165
      %p167 = scmp.ne.s32.totalorder %s156, %s157
      %p168 = scmp.eq.s32.totalorder %s23, 0
      %p169 = por %p167, %p168
      %p170 = scmp.ne.s32.totalorder %s156, %s157
      %p171 = scmp.eq.s32.totalorder %s24, 1
      %p172 = por %p170, %p171
      %p174 = scmp.ne.s32.totalorder %s157, %s173
      %p175 = scmp.eq.s32.totalorder %s24, 0
      %p176 = por %p174, %p175
      %s178 = sadd.s32 %s177, 1
      %p181 = scmp.eq.s32.totalorder %s18, 1
      %p182 = scmp.ne.s32.totalorder %s177, %s179
      %p183 = scmp.eq.s32.totalorder %s18, 0
      %p184 = por %p182, %p183
      %p185 = scmp.ne.s32.totalorder %s177, %s179
      %p186 = scmp.eq.s32.totalorder %s23, 1
      %p187 = por %p185, %p186
      %p188 = scmp.ne.s32.totalorder %s179, %s180
      %p189 = scmp.eq.s32.totalorder %s23, 0
      %p190 = por %p188, %p189
      %p191 = scmp.ne.s32.totalorder %s179, %s180
      %p192 = scmp.eq.s32.totalorder %s24, 1
      %p193 = por %p191, %p192
      %p195 = scmp.ne.s32.totalorder %s180, %s194
      %p196 = scmp.eq.s32.totalorder %s24, 0
      %p197 = por %p195, %p196
      %s199 = sadd.s32 %s198, 1
      %p202 = scmp.eq.s32.totalorder %s18, 1
      %p203 = scmp.ne.s32.totalorder %s198, %s200
      %p204 = scmp.eq.s32.totalorder %s18, 0
      %p205 = por %p203, %p204
      %p206 = scmp.ne.s32.totalorder %s198, %s200
      %p207 = scmp.eq.s32.totalorder %s23, 1
      %p208 = por %p206, %p207
      %p209 = scmp.ne.s32.totalorder %s200, %s201
      %p210 = scmp.eq.s32.totalorder %s23, 0
      %p211 = por %p209, %p210
      %p212 = scmp.ne.s32.totalorder %s200, %s201
      %p213 = scmp.eq.s32.totalorder %s24, 1
      %p214 = por %p212, %p213
      %p216 = scmp.ne.s32.totalorder %s201, %s215
      %p217 = scmp.eq.s32.totalorder %s24, 0
      %p218 = por %p216, %p217
      %s220 = sadd.s32 %s219, 1
      %p223 = scmp.eq.s32.totalorder %s18, 1
      %p224 = scmp.ne.s32.totalorder %s219, %s221
      %p225 = scmp.eq.s32.totalorder %s18, 0
      %p226 = por %p224, %p225
      %p227 = scmp.ne.s32.totalorder %s219, %s221
      %p228 = scmp.eq.s32.totalorder %s23, 1
      %p229 = por %p227, %p228
      %p230 = scmp.ne.s32.totalorder %s221, %s222
      %p231 = scmp.eq.s32.totalorder %s23, 0
      %p232 = por %p230, %p231
      %p233 = scmp.ne.s32.totalorder %s221, %s222
      %p234 = scmp.eq.s32.totalorder %s24, 1
      %p235 = por %p233, %p234
      %p237 = scmp.ne.s32.totalorder %s222, %s236
      %p238 = scmp.eq.s32.totalorder %s24, 0
      %p239 = por %p237, %p238
      %s241 = sadd.s32 %s240, 1
      %p244 = scmp.eq.s32.totalorder %s18, 1
      %p245 = scmp.ne.s32.totalorder %s240, %s242
      %p246 = scmp.eq.s32.totalorder %s18, 0
      %p247 = por %p245, %p246
      %p248 = scmp.ne.s32.totalorder %s240, %s242
      %p249 = scmp.eq.s32.totalorder %s23, 1
      %p250 = por %p248, %p249
      %p251 = scmp.ne.s32.totalorder %s242, %s243
      %p252 = scmp.eq.s32.totalorder %s23, 0
      %p253 = por %p251, %p252
      %p254 = scmp.ne.s32.totalorder %s242, %s243
      %p255 = scmp.eq.s32.totalorder %s24, 1
      %p256 = por %p254, %p255
      %p258 = scmp.ne.s32.totalorder %s243, %s257
      %p259 = scmp.eq.s32.totalorder %s24, 0
      %p260 = por %p258, %p259
      %s261 = ssub.s32 %s18, %s25
      %p262 = scmp.eq.s32.totalorder %s261, 0
      %s264 = sadd.s32 %s263, 1
      %s265 = scalar_select %p262, %s263, %s264
      %p268 = pneg %p262
      %p269 = scmp.eq.s32.totalorder %s18, 1
      %p270 = por %p268, %p269
      %p271 = scmp.ne.s32.totalorder %s263, %s266
      %p272 = scmp.eq.s32.totalorder %s18, 0
      %p273 = por %p271, %p272
      %p274 = scmp.ne.s32.totalorder %s263, %s266
      %p275 = scmp.eq.s32.totalorder %s23, 1
      %p276 = por %p274, %p275
      %p277 = scmp.ne.s32.totalorder %s266, %s267
      %p278 = scmp.eq.s32.totalorder %s23, 0
      %p279 = por %p277, %p278
      %p280 = scmp.ne.s32.totalorder %s266, %s267
      %p281 = scmp.eq.s32.totalorder %s24, 1
      %p282 = por %p280, %p281
      %p284 = scmp.ne.s32.totalorder %s267, %s283
      %p285 = scmp.eq.s32.totalorder %s24, 0
      %p286 = por %p284, %p285
      %p287 = scmp.le.s32.totalorder 1, %s18
      %p288 = scmp.lt.s32.totalorder %s18, 3
      %p289 = pnand %p287, %p288
      %p290 = pneg %p289
      // Predicated region
      $region9: #{gine_forward.1} parent=5 // pred_check
        _
      $region10: #{gine_forward.1} parent=5 // pred_check_branch
        %292 = sbr.rel (%p289) target = $region12
      $region11: #{gine_forward.1} parent=5 // pred_region
        %s293 = ssub.s32 %s18, 1
        // Predicated region
        $region13: #{gine_forward.1} parent=11 // pred_check
          %p294 = pneg %p39
        $region14: #{gine_forward.1} parent=11 // pred_check_branch
          %296 = sbr.rel (%p294) target = $region16
        $region15: #{gine_forward.1} parent=11 // pred_region
          %s298 = ssub.s32 16, 16
          %299 = vsyncadd [#allocation4], %s298
          %s301 = sshll.u32 %s0, 4
          %s302 = int_to_ptr.vmem [resolvable:$true] %s301
          %304 = dma.vmem_to_smem %s302, 16, [#allocation2], [#allocation4]
        $region16: #{gine_forward.1} parent=11 // pred_fallthru
          _
        // Predicated region
        $region17: #{gine_forward.1} parent=11 // pred_check
          %p305 = pneg %p190
        $region18: #{gine_forward.1} parent=11 // pred_check_branch
          %307 = sbr.rel (%p305) target = $region20
        $region19: #{gine_forward.1} parent=11 // pred_region
          _
        $region20: #{gine_forward.1} parent=11 // pred_fallthru
          _
        // Predicated region
        $region21: #{gine_forward.1} parent=11 // pred_check
          %p308 = pneg %p211
        $region22: #{gine_forward.1} parent=11 // pred_check_branch
          %310 = sbr.rel (%p308) target = $region24
        $region23: #{gine_forward.1} parent=11 // pred_region
          _
        $region24: #{gine_forward.1} parent=11 // pred_fallthru
          _
        // Predicated region
        $region25: #{gine_forward.1} parent=11 // pred_check
          %p311 = pneg %p232
        $region26: #{gine_forward.1} parent=11 // pred_check_branch
          %313 = sbr.rel (%p311) target = $region28
        $region27: #{gine_forward.1} parent=11 // pred_region
          %s315 = ssub.s32 10240, 10240
          %316 = vsyncadd [#allocation3], %s315
          %s317 = sshll.u32 [#allocation5], 4
          %s318 = int_to_ptr.vmem [resolvable:$true] %s317
          %323 = dma.hbm_to_vmem [thread:$0]  %s8, 10240, %s318, [#allocation3], 128, 128, 8
        $region28: #{gine_forward.1} parent=11 // pred_fallthru
          _
        // Predicated region
        $region29: #{gine_forward.1} parent=11 // pred_check
          %p324 = pneg %p253
        $region30: #{gine_forward.1} parent=11 // pred_check_branch
          %326 = sbr.rel (%p324) target = $region32
        $region31: #{gine_forward.1} parent=11 // pred_region
          _
        $region32: #{gine_forward.1} parent=11 // pred_fallthru
          _
      $region12: #{gine_forward.1} parent=5 // pred_fallthru
        _
      %p327 = scmp.lt.s32.totalorder %s18, 2
      // Predicated region
      $region33: #{gine_forward.1} parent=5 // pred_check
        %p328 = pneg %p327
      $region34: #{gine_forward.1} parent=5 // pred_check_branch
        %330 = sbr.rel (%p328) target = $region36
      $region35: #{gine_forward.1} parent=5 // pred_region
        // Predicated region
        $region37: #{gine_forward.1} parent=35 // pred_check
          %p331 = pneg %p59
        $region38: #{gine_forward.1} parent=35 // pred_check_branch
          %333 = sbr.rel (%p331) target = $region40
        $region39: #{gine_forward.1} parent=35 // pred_region
          %p334 = scmp.lt.s32.totalorder %s18, 1
          %s335 = scalar_select %p334, %s18, 1
          %s336 = smul.addr %s335, 4
          %s337 = smul.addr %s336, 8
          %s338 = scalar_lea.vmem %s1, %s337
        $region40: #{gine_forward.1} parent=35 // pred_fallthru
          _
        // Predicated region
        $region41: #{gine_forward.1} parent=35 // pred_check
          %p339 = pneg %p85
        $region42: #{gine_forward.1} parent=35 // pred_check_branch
          %341 = sbr.rel (%p339) target = $region44
        $region43: #{gine_forward.1} parent=35 // pred_region
          %p342 = scmp.lt.s32.totalorder %s18, 1
          %s343 = scalar_select %p342, %s18, 1
          %s344 = smul.addr %s343, 8
          %s345 = smul.addr %s344, 4
          %s346 = scalar_lea.vmem %s2, %s345
        $region44: #{gine_forward.1} parent=35 // pred_fallthru
          _
        // Predicated region
        $region45: #{gine_forward.1} parent=35 // pred_check
          %p347 = pneg %p111
        $region46: #{gine_forward.1} parent=35 // pred_check_branch
          %349 = sbr.rel (%p347) target = $region48
        $region47: #{gine_forward.1} parent=35 // pred_region
          %p350 = scmp.lt.s32.totalorder %s18, 1
          %s351 = scalar_select %p350, %s18, 1
          %s352 = smul.addr %s351, 4
          %s353 = smul.addr %s352, 4
          %s354 = scalar_lea.vmem %s3, %s353
        $region48: #{gine_forward.1} parent=35 // pred_fallthru
          _
        // Predicated region
        $region49: #{gine_forward.1} parent=35 // pred_check
          %p355 = pneg %p137
        $region50: #{gine_forward.1} parent=35 // pred_check_branch
          %357 = sbr.rel (%p355) target = $region52
        $region51: #{gine_forward.1} parent=35 // pred_region
          %p358 = scmp.lt.s32.totalorder %s18, 1
          %s359 = scalar_select %p358, %s18, 1
          %s360 = smul.addr %s359, 4
          %s361 = scalar_lea.vmem %s4, %s360
        $region52: #{gine_forward.1} parent=35 // pred_fallthru
          _
        // Predicated region
        $region53: #{gine_forward.1} parent=35 // pred_check
          %p362 = pneg %p163
        $region54: #{gine_forward.1} parent=35 // pred_check_branch
          %364 = sbr.rel (%p362) target = $region56
        $region55: #{gine_forward.1} parent=35 // pred_region
          %p365 = scmp.lt.s32.totalorder %s18, 1
          %s366 = scalar_select %p365, %s18, 1
          %s367 = smul.addr %s366, 40
          %s368 = smul.addr %s367, 8
          %s369 = scalar_lea.vmem %s5, %s368
        $region56: #{gine_forward.1} parent=35 // pred_fallthru
          _
      $region36: #{gine_forward.1} parent=5 // pred_fallthru
        _
      %p370 = scmp.le.s32.totalorder 1, %s18
      %p371 = scmp.lt.s32.totalorder %s18, 3
      %p372 = pnand %p370, %p371
      %p373 = pneg %p372
      // Predicated region
      $region57: #{gine_forward.1} parent=5 // pred_check
        _
      $region58: #{gine_forward.1} parent=5 // pred_check_branch
        %375 = sbr.rel (%p372) target = $region60
      $region59: #{gine_forward.1} parent=5 // pred_region
        %s376 = ssub.s32 %s18, 1
        // Predicated region
        $region61: #{gine_forward.1} parent=59 // pred_check
          %p377 = pneg %p39
        $region62: #{gine_forward.1} parent=59 // pred_check_branch
          %379 = sbr.rel (%p377) target = $region64
        $region63: #{gine_forward.1} parent=59 // pred_region
          %380 = dma.done [#allocation4], 16
        $region64: #{gine_forward.1} parent=59 // pred_fallthru
          _
        // Predicated region
        $region65: #{gine_forward.1} parent=59 // pred_check
          %p381 = pneg %p232
        $region66: #{gine_forward.1} parent=59 // pred_check_branch
          %383 = sbr.rel (%p381) target = $region68
        $region67: #{gine_forward.1} parent=59 // pred_region
          %384 = dma.done [#allocation3], 10240
        $region68: #{gine_forward.1} parent=59 // pred_fallthru
          _
        %385 = sfence
        %p386 = pneg %p39
        %p387 = pneg %p36
        %p388 = scmp.lt.s32.totalorder %s23, 1
        %s389 = scalar_select %p388, %s23, 1
        %s390 = smul.addr %s389, 4
        %s391 = smul.addr %s390, 8
        %s392 = scalar_lea.vmem %s1, %s391
        %p393 = pneg %p65
        %p394 = pneg %p62
        %p395 = scmp.lt.s32.totalorder %s23, 1
        %s396 = scalar_select %p395, %s23, 1
        %s397 = smul.addr %s396, 8
        %s398 = smul.addr %s397, 4
        %s399 = scalar_lea.vmem %s2, %s398
        %p400 = pneg %p91
        %p401 = pneg %p88
        %p402 = scmp.lt.s32.totalorder %s23, 1
        %s403 = scalar_select %p402, %s23, 1
        %s404 = smul.addr %s403, 4
        %s405 = smul.addr %s404, 4
        %s406 = scalar_lea.vmem %s3, %s405
        %p407 = pneg %p117
        %p408 = pneg %p114
        %p409 = scmp.lt.s32.totalorder %s23, 1
        %s410 = scalar_select %p409, %s23, 1
        %s411 = smul.addr %s410, 4
        %s412 = scalar_lea.vmem %s4, %s411
        %p413 = pneg %p143
        %p414 = pneg %p140
        %p415 = scmp.lt.s32.totalorder %s23, 1
        %s416 = scalar_select %p415, %s23, 1
        %s417 = smul.addr %s416, 40
        %s418 = smul.addr %s417, 8
        %s419 = scalar_lea.vmem %s5, %s418
        %p420 = pneg %p169
        %p421 = pneg %p166
        %p422 = pneg %p190
        %p423 = pneg %p187
        %p424 = pneg %p211
        %p425 = pneg %p208
        %p426 = pneg %p232
        %p427 = pneg %p229
        %p428 = pneg %p253
        %p429 = pneg %p250
        %p430 = pneg %p279
        %p431 = pneg %p276
        %p432 = scmp.lt.s32.totalorder %s23, 1
        %s433 = scalar_select %p432, %s23, 1
        %s434 = smul.addr %s433, 4
        %s435 = scalar_lea.vmem %s10, %s434
        %p436 = scmp.lt.s32.totalorder %s23, 1
        %s437 = scalar_select %p436, %s23, 1
        %s438 = smul.addr %s437, 4
        %s439 = smul.addr %s438, 8
        %s440 = scalar_lea.vmem %s1, %s439
        %p441 = scmp.lt.s32.totalorder %s23, 1
        %s442 = scalar_select %p441, %s23, 1
        %s443 = smul.addr %s442, 8
        %s444 = smul.addr %s443, 4
        %s445 = scalar_lea.vmem %s2, %s444
        %p446 = scmp.lt.s32.totalorder %s23, 1
        %s447 = scalar_select %p446, %s23, 1
        %s448 = smul.addr %s447, 4
        %s449 = smul.addr %s448, 4
        %s450 = scalar_lea.vmem %s3, %s449
        %p451 = scmp.lt.s32.totalorder %s23, 1
        %s452 = scalar_select %p451, %s23, 1
        %s453 = smul.addr %s452, 4
        %s454 = scalar_lea.vmem %s4, %s453
        %p455 = scmp.lt.s32.totalorder %s23, 1
        %s456 = scalar_select %p455, %s23, 1
        %s457 = smul.addr %s456, 40
        %s458 = smul.addr %s457, 8
        %s459 = scalar_lea.vmem %s5, %s458
        %p460 = scmp.lt.s32.totalorder %s23, 1
        %s461 = scalar_select %p460, %s23, 1
        %s462 = smul.addr %s461, 4
        %s463 = scalar_lea.vmem %s10, %s462
        %v465 = vld [vmem:[%s440] sm:$0xff]
        %v466 = vld [vmem:[%s440 + $0x8] sm:$0xff]
        %v467 = vld [vmem:[%s440 + $0x10] sm:$0xff]
        %v468 = vld [vmem:[%s440 + $0x18] sm:$0xff]
        %v469 = vld [vmem:[%s445] sm:$0xf]
        %v470 = vld [vmem:[%s445 + $0x4] sm:$0xf]
        %v471 = vld [vmem:[%s445 + $0x8] sm:$0xf]
        %v472 = vld [vmem:[%s445 + $0xc] sm:$0xf]
        %v473 = vld [vmem:[%s445 + $0x10] sm:$0xf]
        %v474 = vld [vmem:[%s445 + $0x14] sm:$0xf]
        %v475 = vld [vmem:[%s445 + $0x18] sm:$0xf]
        %v476 = vld [vmem:[%s445 + $0x1c] sm:$0xf]
        %v477 = vld [vmem:[%s450] sm:$0xf]
        %v478 = vld [vmem:[%s450 + $0x4] sm:$0xf]
        %v479 = vld [vmem:[%s450 + $0x8] sm:$0xf]
        %v480 = vld [vmem:[%s450 + $0xc] sm:$0xf]
        %v481 = vld [vmem:[%s459] sm:$0xff]
        %v482 = vld [vmem:[%s459 + $0x8] sm:$0xff]
        %v483 = vld [vmem:[%s459 + $0x10] sm:$0xff]
        %v484 = vld [vmem:[%s459 + $0x18] sm:$0xff]
        %v485 = vld [vmem:[%s459 + $0x20] sm:$0xff]
        %v486 = vld [vmem:[%s459 + $0x28] sm:$0xff]
        %v487 = vld [vmem:[%s459 + $0x30] sm:$0xff]
        %v488 = vld [vmem:[%s459 + $0x38] sm:$0xff]
        %v489 = vpack.c.bf16 %v466, %v465
        %v490 = vpack.c.bf16 %v468, %v467
        %v499 = vunpack.c.l.b16 %v469
        %v500 = vunpack.c.l.b16 %v470
        %v501 = vunpack.c.l.b16 %v471
        %v502 = vunpack.c.l.b16 %v472
        %v503 = vunpack.c.l.b16 %v473
        %v504 = vunpack.c.l.b16 %v474
        %v505 = vunpack.c.l.b16 %v475
        %v506 = vunpack.c.l.b16 %v476
        %v507 = vpack.c.b16 %v500, %v499
        %v508 = vpack.c.b16 %v502, %v501
        %v509 = vpack.c.b16 %v504, %v503
        %v510 = vpack.c.b16 %v506, %v505
        %vm511 = vcmask 261120
        %v513 = vsel %vm511, %v507, 0
        %v516 = vsel %vm511, %v508, 0
        %v519 = vsel %vm511, %v509, 0
        %v522 = vsel %vm511, %v510, 0
        %524 = vmatprep.subr.bf16.mxu0 0
        %525 = vmatpush1.bf16.msra.mxu0 %v489
        %526 = vmatprep.subr.bf16.mxu0 0
        %527 = vmatpush1.bf16.msra.mxu0 %v490
        %528 = vmatprep.subr.bf16.mxu0 0
        %529 = vmatpush1.bf16.msra.mxu0 0
        %530 = vmatprep.subr.bf16.mxu0 0
        %531 = vmatpush1.bf16.msra.mxu0 0
        %532 = vmatprep.subr.bf16.mxu0 0
        %533 = vmatpush1.bf16.msra.mxu0 0
        %534 = vmatprep.subr.bf16.mxu0 0
        %535 = vmatpush1.bf16.msra.mxu0 0
        %536 = vmatprep.subr.bf16.mxu0 0
        %537 = vmatpush1.bf16.msra.mxu0 0
        %538 = vmatprep.subr.bf16.mxu0 0
        %539 = vmatpush1.bf16.msra.mxu0 0
        %540 = vmatprep.subr.bf16.mxu0 0
        %541 = vmatpush1.bf16.msra.mxu0 0
        %542 = vmatprep.subr.bf16.mxu0 0
        %543 = vmatpush1.bf16.msra.mxu0 0
        %544 = vmatprep.subr.bf16.mxu0 0
        %545 = vmatpush1.bf16.msra.mxu0 0
        %546 = vmatprep.subr.bf16.mxu0 0
        %547 = vmatpush1.bf16.msra.mxu0 0
        %548 = vmatprep.subr.bf16.mxu0 0
        %549 = vmatpush1.bf16.msra.mxu0 0
        %550 = vmatprep.subr.bf16.mxu0 0
        %551 = vmatpush1.bf16.msra.mxu0 0
        %552 = vmatprep.subr.bf16.mxu0 0
        %553 = vmatpush1.bf16.msra.mxu0 0
        %554 = vmatprep.subr.bf16.mxu0 0
        %555 = vmatpush1.bf16.msra.mxu0 0
        %556 = vmatprep.mubr.bf16.mxu0 0
        %557 = vmatmul.mubr.bf16.gmra.mrb[0].mxu0 %v513
        %v558 = vpop.f32.mrb[0].mxu0
        %v559 = vadd.f32 %v481, %v558
        %v560 = vpop.f32.mrb[0].mxu0
        %v561 = vpop.f32.mrb[0].mxu0
        %v562 = vadd.f32 %v482, %v561
        %v563 = vpop.f32.mrb[0].mxu0
        %564 = vmatprep.mubr.bf16.mxu0 0
        %565 = vmatmul.mubr.bf16.gmra.mrb[0].mxu0 %v516
        %v566 = vpop.f32.mrb[0].mxu0
        %v567 = vadd.f32 %v483, %v566
        %v568 = vpop.f32.mrb[0].mxu0
        %v569 = vpop.f32.mrb[0].mxu0
        %v570 = vadd.f32 %v484, %v569
        %v571 = vpop.f32.mrb[0].mxu0
        %572 = vmatprep.mubr.bf16.mxu0 0
        %573 = vmatmul.mubr.bf16.gmra.mrb[0].mxu0 %v519
        %v574 = vpop.f32.mrb[0].mxu0
        %v575 = vadd.f32 %v485, %v574
        %v576 = vpop.f32.mrb[0].mxu0
        %v577 = vpop.f32.mrb[0].mxu0
        %v578 = vadd.f32 %v486, %v577
        %v579 = vpop.f32.mrb[0].mxu0
        %580 = vmatprep.mubr.bf16.mxu0 0
        %581 = vmatmul.mubr.bf16.gmra.mrb[0].mxu0 %v522
        %v582 = vpop.f32.mrb[0].mxu0
        %v583 = vadd.f32 %v487, %v582
        %v584 = vpop.f32.mrb[0].mxu0
        %v585 = vpop.f32.mrb[0].mxu0
        %v586 = vadd.f32 %v488, %v585
        %v587 = vpop.f32.mrb[0].mxu0
        %588 = vdwg.mxu0
        %v589 = vmax.f32 %v559, 0.0
        %v590 = vmax.f32 %v562, 0.0
        %v591 = vmax.f32 %v567, 0.0
        %v592 = vmax.f32 %v570, 0.0
        %v593 = vmax.f32 %v575, 0.0
        %v594 = vmax.f32 %v578, 0.0
        %v595 = vmax.f32 %v583, 0.0
        %v596 = vmax.f32 %v586, 0.0
        %v597 = vpack.c.bf16 %v590, %v589
        %v598 = vpack.c.bf16 %v592, %v591
        %v599 = vpack.c.bf16 %v594, %v593
        %v600 = vpack.c.bf16 %v596, %v595
        %v605 = vunpack.c.l.b16 %v477
        %v606 = vunpack.c.l.b16 %v478
        %v607 = vunpack.c.l.b16 %v479
        %v608 = vunpack.c.l.b16 %v480
        %v609 = vpack.c.b16 %v606, %v605
        %v610 = vpack.c.b16 %v608, %v607
        %vm611 = vcmask 523264
        %v613 = vsel %vm611, %v609, 0
        %v616 = vsel %vm611, %v610, 0
        %618 = vmatprep.subr.bf16.mxu0 0
        %619 = vmatpush1.bf16.msra.mxu0 %v597
        %620 = vmatprep.subr.bf16.mxu0 0
        %621 = vmatpush1.bf16.msra.mxu0 %v598
        %622 = vmatprep.subr.bf16.mxu0 0
        %623 = vmatpush1.bf16.msra.mxu0 %v599
        %624 = vmatprep.subr.bf16.mxu0 0
        %625 = vmatpush1.bf16.msra.mxu0 %v600
        %626 = vmatprep.subr.bf16.mxu0 0
        %627 = vmatpush1.bf16.msra.mxu0 0
        %628 = vmatprep.subr.bf16.mxu0 0
        %629 = vmatpush1.bf16.msra.mxu0 0
        %630 = vmatprep.subr.bf16.mxu0 0
        %631 = vmatpush1.bf16.msra.mxu0 0
        %632 = vmatprep.subr.bf16.mxu0 0
        %633 = vmatpush1.bf16.msra.mxu0 0
        %634 = vmatprep.subr.bf16.mxu0 0
        %635 = vmatpush1.bf16.msra.mxu0 0
        %636 = vmatprep.subr.bf16.mxu0 0
        %637 = vmatpush1.bf16.msra.mxu0 0
        %638 = vmatprep.subr.bf16.mxu0 0
        %639 = vmatpush1.bf16.msra.mxu0 0
        %640 = vmatprep.subr.bf16.mxu0 0
        %641 = vmatpush1.bf16.msra.mxu0 0
        %642 = vmatprep.subr.bf16.mxu0 0
        %643 = vmatpush1.bf16.msra.mxu0 0
        %644 = vmatprep.subr.bf16.mxu0 0
        %645 = vmatpush1.bf16.msra.mxu0 0
        %646 = vmatprep.subr.bf16.mxu0 0
        %647 = vmatpush1.bf16.msra.mxu0 0
        %648 = vmatprep.subr.bf16.mxu0 0
        %649 = vmatpush1.bf16.msra.mxu0 0
        %650 = vmatprep.mubr.bf16.mxu0 0
        %651 = vmatmul.mubr.bf16.gmra.mrb[0].mxu0 %v613
        %v652 = vpop.f32.mrb[0].mxu0
        %v653 = vadd.f32 0.0, %v652
        %v654 = vpop.f32.mrb[0].mxu0
        %v655 = vpop.f32.mrb[0].mxu0
        %v656 = vadd.f32 0.0, %v655
        %v657 = vpop.f32.mrb[0].mxu0
        %658 = vmatprep.mubr.bf16.mxu0 0
        %659 = vmatmul.mubr.bf16.gmra.mrb[0].mxu0 %v616
        %v660 = vpop.f32.mrb[0].mxu0
        %v661 = vadd.f32 0.0, %v660
        %v662 = vpop.f32.mrb[0].mxu0
        %v663 = vpop.f32.mrb[0].mxu0
        %v664 = vadd.f32 0.0, %v663
        %v665 = vpop.f32.mrb[0].mxu0
        %666 = vdwg.mxu0
        %s667 = sld [smem:[#allocation2]]
        %v668 = vstv %s667
        %v669 = vmul.f32 %v668, %v465
        %v670 = vmul.f32 %v668, %v466
        %v671 = vmul.f32 %v668, %v467
        %v672 = vmul.f32 %v668, %v468
        %v673 = vadd.f32 %v669, %v653
        %v674 = vadd.f32 %v670, %v656
        %v675 = vadd.f32 %v671, %v661
        %v676 = vadd.f32 %v672, %v664
        %v677 = vld [vmem:[%s6] sm:$0xff]
        %v678 = vld [vmem:[%s6 + $0x8] sm:$0xff]
        %v679 = vld [vmem:[%s6 + $0x10] sm:$0xff]
        %v680 = vld [vmem:[%s6 + $0x18] sm:$0xff]
        %v681 = vld [vmem:[%s6 + $0x20] sm:$0xff]
        %v682 = vld [vmem:[%s6 + $0x28] sm:$0xff]
        %v683 = vld [vmem:[%s6 + $0x30] sm:$0xff]
        %v684 = vld [vmem:[%s6 + $0x38] sm:$0xff]
        %v685 = vld [vmem:[%s6 + $0x40] sm:$0xff]
        %v686 = vld [vmem:[%s6 + $0x48] sm:$0xff]
        %v687 = vld [vmem:[%s6 + $0x50] sm:$0xff]
        %v688 = vld [vmem:[%s6 + $0x58] sm:$0xff]
        %v689 = vld [vmem:[%s6 + $0x60] sm:$0xff]
        %v690 = vld [vmem:[%s6 + $0x68] sm:$0xff]
        %v691 = vld [vmem:[%s6 + $0x70] sm:$0xff]
        %v692 = vld [vmem:[%s6 + $0x78] sm:$0xff]
        %v693 = vld [vmem:[%s7] sm:$0x1]
        %v695 = vlaneseq
        %v696 = vshrl.u32 %v695, 7
        %v697 = vsub.s32 0, %v696
        %v698 = vrot.slane %v693, %v697
        %700 = vmatprep.subr.mxu0 0.0
        %701 = vmatpush1.msra.mxu0 %v677
        %702 = vmatprep.subr.mxu0 0.0
        %703 = vmatpush1.msra.mxu0 %v678
        %704 = vmatprep.subr.mxu0 0.0
        %705 = vmatpush1.msra.mxu0 %v679
        %706 = vmatprep.subr.mxu0 0.0
        %707 = vmatpush1.msra.mxu0 %v680
        %708 = vmatprep.subr.mxu0 0.0
        %709 = vmatpush1.msra.mxu0 %v681
        %710 = vmatprep.subr.mxu0 0.0
        %711 = vmatpush1.msra.mxu0 %v682
        %712 = vmatprep.subr.mxu0 0.0
        %713 = vmatpush1.msra.mxu0 %v683
        %714 = vmatprep.subr.mxu0 0.0
        %715 = vmatpush1.msra.mxu0 %v684
        %716 = vmatprep.subr.mxu0 0.0
        %717 = vmatpush1.msra.mxu0 %v685
        %718 = vmatprep.subr.mxu0 0.0
        %719 = vmatpush1.msra.mxu0 %v686
        %720 = vmatprep.subr.mxu0 0.0
        %721 = vmatpush1.msra.mxu0 %v687
        %722 = vmatprep.subr.mxu0 0.0
        %723 = vmatpush1.msra.mxu0 %v688
        %724 = vmatprep.subr.mxu0 0.0
        %725 = vmatpush1.msra.mxu0 %v689
        %726 = vmatprep.subr.mxu0 0.0
        %727 = vmatpush1.msra.mxu0 %v690
        %728 = vmatprep.subr.mxu0 0.0
        %729 = vmatpush1.msra.mxu0 %v691
        %730 = vmatprep.subr.mxu0 0.0
        %731 = vmatpush1.msra.mxu0 %v692
        %732 = vmatprep.subr.mxu0 0.0
        %733 = vmatpush1.msra.mxu0 0.0
        %734 = vmatprep.subr.mxu0 0.0
        %735 = vmatpush1.msra.mxu0 0.0
        %736 = vmatprep.subr.mxu0 0.0
        %737 = vmatpush1.msra.mxu0 0.0
        %738 = vmatprep.subr.mxu0 0.0
        %739 = vmatpush1.msra.mxu0 0.0
        %740 = vmatprep.subr.mxu0 0.0
        %741 = vmatpush1.msra.mxu0 0.0
        %742 = vmatprep.subr.mxu0 0.0
        %743 = vmatpush1.msra.mxu0 0.0
        %744 = vmatprep.subr.mxu0 0.0
        %745 = vmatpush1.msra.mxu0 0.0
        %746 = vmatprep.subr.mxu0 0.0
        %747 = vmatpush1.msra.mxu0 0.0
        %748 = vmatprep.subr.mxu0 0.0
        %749 = vmatpush1.msra.mxu0 0.0
        %750 = vmatprep.subr.mxu0 0.0
        %751 = vmatpush1.msra.mxu0 0.0
        %752 = vmatprep.subr.mxu0 0.0
        %753 = vmatpush1.msra.mxu0 0.0
        %754 = vmatprep.subr.mxu0 0.0
        %755 = vmatpush1.msra.mxu0 0.0
        %756 = vmatprep.subr.mxu0 0.0
        %757 = vmatpush1.msra.mxu0 0.0
        %758 = vmatprep.subr.mxu0 0.0
        %759 = vmatpush1.msra.mxu0 0.0
        %760 = vmatprep.subr.mxu0 0.0
        %761 = vmatpush1.msra.mxu0 0.0
        %762 = vmatprep.subr.mxu0 0.0
        %763 = vmatpush1.msra.mxu0 0.0
        %764 = vmatprep.mubr.f32.mxu0 0.0
        %765 = vmatmul.mubr.f32.gmra.mrb[0].mxu0 %v673
        %v766 = vpop.f32.mrb[0].mxu0
        %v767 = vadd.f32 %v698, %v766
        %v768 = vpop.f32.mrb[0].mxu0
        %769 = vmatprep.mubr.f32.mxu0 0.0
        %770 = vmatmul.mubr.f32.gmra.mrb[0].mxu0 %v674
        %v771 = vpop.f32.mrb[0].mxu0
        %v772 = vadd.f32 %v698, %v771
        %v773 = vpop.f32.mrb[0].mxu0
        %774 = vmatprep.mubr.f32.mxu0 0.0
        %775 = vmatmul.mubr.f32.gmra.mrb[0].mxu0 %v675
        %v776 = vpop.f32.mrb[0].mxu0
        %v777 = vadd.f32 %v698, %v776
        %v778 = vpop.f32.mrb[0].mxu0
        %779 = vmatprep.mubr.f32.mxu0 0.0
        %780 = vmatmul.mubr.f32.gmra.mrb[0].mxu0 %v676
        %v781 = vpop.f32.mrb[0].mxu0
        %v782 = vadd.f32 %v698, %v781
        %v783 = vpop.f32.mrb[0].mxu0
        %784 = vdwg.mxu0
        %v785 = vmax.f32 %v767, 0.0
        %v786 = vmax.f32 %v772, 0.0
        %v787 = vmax.f32 %v777, 0.0
        %v788 = vmax.f32 %v782, 0.0
        %v789 = vld [vmem:[#allocation5] sm:$0xff]
        %v790 = vld [vmem:[#allocation5 + $0x8] sm:$0xff]
        %v791 = vld [vmem:[#allocation5 + $0x10] sm:$0xff]
        %v792 = vld [vmem:[#allocation5 + $0x18] sm:$0xff]
        %v793 = vld [vmem:[#allocation5 + $0x20] sm:$0xff]
        %v794 = vld [vmem:[#allocation5 + $0x28] sm:$0xff]
        %v795 = vld [vmem:[#allocation5 + $0x30] sm:$0xff]
        %v796 = vld [vmem:[#allocation5 + $0x38] sm:$0xff]
        %v797 = vld [vmem:[#allocation5 + $0x40] sm:$0xff]
        %v798 = vld [vmem:[#allocation5 + $0x48] sm:$0xff]
        %v799 = vld [vmem:[#allocation5 + $0x50] sm:$0xff]
        %v800 = vld [vmem:[#allocation5 + $0x58] sm:$0xff]
        %v801 = vld [vmem:[#allocation5 + $0x60] sm:$0xff]
        %v802 = vld [vmem:[#allocation5 + $0x68] sm:$0xff]
        %v803 = vld [vmem:[#allocation5 + $0x70] sm:$0xff]
        %v804 = vld [vmem:[#allocation5 + $0x78] sm:$0xff]
        %v805 = vld [vmem:[%s9] sm:$0x1]
        %v807 = vlaneseq
        %v808 = vshrl.u32 %v807, 7
        %v809 = vsub.s32 0, %v808
        %v810 = vrot.slane %v805, %v809
        %812 = vmatprep.subr.mxu0 0.0
        %813 = vmatpush1.msra.mxu0 %v789
        %814 = vmatprep.subr.mxu0 0.0
        %815 = vmatpush1.msra.mxu0 %v790
        %816 = vmatprep.subr.mxu0 0.0
        %817 = vmatpush1.msra.mxu0 %v791
        %818 = vmatprep.subr.mxu0 0.0
        %819 = vmatpush1.msra.mxu0 %v792
        %820 = vmatprep.subr.mxu0 0.0
        %821 = vmatpush1.msra.mxu0 %v793
        %822 = vmatprep.subr.mxu0 0.0
        %823 = vmatpush1.msra.mxu0 %v794
        %824 = vmatprep.subr.mxu0 0.0
        %825 = vmatpush1.msra.mxu0 %v795
        %826 = vmatprep.subr.mxu0 0.0
        %827 = vmatpush1.msra.mxu0 %v796
        %828 = vmatprep.subr.mxu0 0.0
        %829 = vmatpush1.msra.mxu0 %v797
        %830 = vmatprep.subr.mxu0 0.0
        %831 = vmatpush1.msra.mxu0 %v798
        %832 = vmatprep.subr.mxu0 0.0
        %833 = vmatpush1.msra.mxu0 %v799
        %834 = vmatprep.subr.mxu0 0.0
        %835 = vmatpush1.msra.mxu0 %v800
        %836 = vmatprep.subr.mxu0 0.0
        %837 = vmatpush1.msra.mxu0 %v801
        %838 = vmatprep.subr.mxu0 0.0
        %839 = vmatpush1.msra.mxu0 %v802
        %840 = vmatprep.subr.mxu0 0.0
        %841 = vmatpush1.msra.mxu0 %v803
        %842 = vmatprep.subr.mxu0 0.0
        %843 = vmatpush1.msra.mxu0 %v804
        %844 = vmatprep.subr.mxu0 0.0
        %845 = vmatpush1.msra.mxu0 0.0
        %846 = vmatprep.subr.mxu0 0.0
        %847 = vmatpush1.msra.mxu0 0.0
        %848 = vmatprep.subr.mxu0 0.0
        %849 = vmatpush1.msra.mxu0 0.0
        %850 = vmatprep.subr.mxu0 0.0
        %851 = vmatpush1.msra.mxu0 0.0
        %852 = vmatprep.subr.mxu0 0.0
        %853 = vmatpush1.msra.mxu0 0.0
        %854 = vmatprep.subr.mxu0 0.0
        %855 = vmatpush1.msra.mxu0 0.0
        %856 = vmatprep.subr.mxu0 0.0
        %857 = vmatpush1.msra.mxu0 0.0
        %858 = vmatprep.subr.mxu0 0.0
        %859 = vmatpush1.msra.mxu0 0.0
        %860 = vmatprep.subr.mxu0 0.0
        %861 = vmatpush1.msra.mxu0 0.0
        %862 = vmatprep.subr.mxu0 0.0
        %863 = vmatpush1.msra.mxu0 0.0
        %864 = vmatprep.subr.mxu0 0.0
        %865 = vmatpush1.msra.mxu0 0.0
        %866 = vmatprep.subr.mxu0 0.0
        %867 = vmatpush1.msra.mxu0 0.0
        %868 = vmatprep.subr.mxu0 0.0
        %869 = vmatpush1.msra.mxu0 0.0
        %870 = vmatprep.subr.mxu0 0.0
        %871 = vmatpush1.msra.mxu0 0.0
        %872 = vmatprep.subr.mxu0 0.0
        %873 = vmatpush1.msra.mxu0 0.0
        %874 = vmatprep.subr.mxu0 0.0
        %875 = vmatpush1.msra.mxu0 0.0
        %876 = vmatprep.mubr.f32.mxu0 0.0
        %877 = vmatmul.mubr.f32.gmra.mrb[0].mxu0 %v785
        %v878 = vpop.f32.mrb[0].mxu0
        %v879 = vadd.f32 %v810, %v878
        %v880 = vpop.f32.mrb[0].mxu0
        %881 = vmatprep.mubr.f32.mxu0 0.0
        %882 = vmatmul.mubr.f32.gmra.mrb[0].mxu0 %v786
        %v883 = vpop.f32.mrb[0].mxu0
        %v884 = vadd.f32 %v810, %v883
        %v885 = vpop.f32.mrb[0].mxu0
        %886 = vmatprep.mubr.f32.mxu0 0.0
        %887 = vmatmul.mubr.f32.gmra.mrb[0].mxu0 %v787
        %v888 = vpop.f32.mrb[0].mxu0
        %v889 = vadd.f32 %v810, %v888
        %v890 = vpop.f32.mrb[0].mxu0
        %891 = vmatprep.mubr.f32.mxu0 0.0
        %892 = vmatmul.mubr.f32.gmra.mrb[0].mxu0 %v788
        %v893 = vpop.f32.mrb[0].mxu0
        %v894 = vadd.f32 %v810, %v893
        %v895 = vpop.f32.mrb[0].mxu0
        %896 = vdwg.mxu0
        %v897 = vmax.f32 %v879, 0.0
        %v898 = vmax.f32 %v884, 0.0
        %v899 = vmax.f32 %v889, 0.0
        %v900 = vmax.f32 %v894, 0.0
        %s901 = scalar_lea.vmem %s459, 64
        %v902 = vld [vmem:[%s901] sm:$0xff]
        %v903 = vld [vmem:[%s901 + $0x8] sm:$0xff]
        %v904 = vld [vmem:[%s901 + $0x10] sm:$0xff]
        %v905 = vld [vmem:[%s901 + $0x18] sm:$0xff]
        %v906 = vld [vmem:[%s901 + $0x20] sm:$0xff]
        %v907 = vld [vmem:[%s901 + $0x28] sm:$0xff]
        %v908 = vld [vmem:[%s901 + $0x30] sm:$0xff]
        %v909 = vld [vmem:[%s901 + $0x38] sm:$0xff]
        %v910 = vpack.c.bf16 %v898, %v897
        %v911 = vpack.c.bf16 %v900, %v899
        %912 = vmatprep.subr.bf16.mxu0 0
        %913 = vmatpush1.bf16.msra.mxu0 %v910
        %914 = vmatprep.subr.bf16.mxu0 0
        %915 = vmatpush1.bf16.msra.mxu0 %v911
        %916 = vmatprep.subr.bf16.mxu0 0
        %917 = vmatpush1.bf16.msra.mxu0 0
        %918 = vmatprep.subr.bf16.mxu0 0
        %919 = vmatpush1.bf16.msra.mxu0 0
        %920 = vmatprep.subr.bf16.mxu0 0
        %921 = vmatpush1.bf16.msra.mxu0 0
        %922 = vmatprep.subr.bf16.mxu0 0
        %923 = vmatpush1.bf16.msra.mxu0 0
        %924 = vmatprep.subr.bf16.mxu0 0
        %925 = vmatpush1.bf16.msra.mxu0 0
        %926 = vmatprep.subr.bf16.mxu0 0
        %927 = vmatpush1.bf16.msra.mxu0 0
        %928 = vmatprep.subr.bf16.mxu0 0
        %929 = vmatpush1.bf16.msra.mxu0 0
        %930 = vmatprep.subr.bf16.mxu0 0
        %931 = vmatpush1.bf16.msra.mxu0 0
        %932 = vmatprep.subr.bf16.mxu0 0
        %933 = vmatpush1.bf16.msra.mxu0 0
        %934 = vmatprep.subr.bf16.mxu0 0
        %935 = vmatpush1.bf16.msra.mxu0 0
        %936 = vmatprep.subr.bf16.mxu0 0
        %937 = vmatpush1.bf16.msra.mxu0 0
        %938 = vmatprep.subr.bf16.mxu0 0
        %939 = vmatpush1.bf16.msra.mxu0 0
        %940 = vmatprep.subr.bf16.mxu0 0
        %941 = vmatpush1.bf16.msra.mxu0 0
        %942 = vmatprep.subr.bf16.mxu0 0
        %943 = vmatpush1.bf16.msra.mxu0 0
        %944 = vmatprep.mubr.bf16.mxu0 0
        %945 = vmatmul.mubr.bf16.gmra.mrb[0].mxu0 %v513
        %v946 = vpop.f32.mrb[0].mxu0
        %v947 = vadd.f32 %v902, %v946
        %v948 = vpop.f32.mrb[0].mxu0
        %v949 = vpop.f32.mrb[0].mxu0
        %v950 = vadd.f32 %v903, %v949
        %v951 = vpop.f32.mrb[0].mxu0
        %952 = vmatprep.mubr.bf16.mxu0 0
        %953 = vmatmul.mubr.bf16.gmra.mrb[0].mxu0 %v516
        %v954 = vpop.f32.mrb[0].mxu0
        %v955 = vadd.f32 %v904, %v954
        %v956 = vpop.f32.mrb[0].mxu0
        %v957 = vpop.f32.mrb[0].mxu0
        %v958 = vadd.f32 %v905, %v957
        %v959 = vpop.f32.mrb[0].mxu0
        %960 = vmatprep.mubr.bf16.mxu0 0
        %961 = vmatmul.mubr.bf16.gmra.mrb[0].mxu0 %v519
        %v962 = vpop.f32.mrb[0].mxu0
        %v963 = vadd.f32 %v906, %v962
        %v964 = vpop.f32.mrb[0].mxu0
        %v965 = vpop.f32.mrb[0].mxu0
        %v966 = vadd.f32 %v907, %v965
        %v967 = vpop.f32.mrb[0].mxu0
        %968 = vmatprep.mubr.bf16.mxu0 0
        %969 = vmatmul.mubr.bf16.gmra.mrb[0].mxu0 %v522
        %v970 = vpop.f32.mrb[0].mxu0
        %v971 = vadd.f32 %v908, %v970
        %v972 = vpop.f32.mrb[0].mxu0
        %v973 = vpop.f32.mrb[0].mxu0
        %v974 = vadd.f32 %v909, %v973
        %v975 = vpop.f32.mrb[0].mxu0
        %976 = vdwg.mxu0
        %v977 = vmax.f32 %v947, 0.0
        %v978 = vmax.f32 %v950, 0.0
        %v979 = vmax.f32 %v955, 0.0
        %v980 = vmax.f32 %v958, 0.0
        %v981 = vmax.f32 %v963, 0.0
        %v982 = vmax.f32 %v966, 0.0
        %v983 = vmax.f32 %v971, 0.0
        %v984 = vmax.f32 %v974, 0.0
        %v985 = vpack.c.bf16 %v978, %v977
        %v986 = vpack.c.bf16 %v980, %v979
        %v987 = vpack.c.bf16 %v982, %v981
        %v988 = vpack.c.bf16 %v984, %v983
        %989 = vmatprep.subr.bf16.mxu0 0
        %990 = vmatpush1.bf16.msra.mxu0 %v985
        %991 = vmatprep.subr.bf16.mxu0 0
        %992 = vmatpush1.bf16.msra.mxu0 %v986
        %993 = vmatprep.subr.bf16.mxu0 0
        %994 = vmatpush1.bf16.msra.mxu0 %v987
        %995 = vmatprep.subr.bf16.mxu0 0
        %996 = vmatpush1.bf16.msra.mxu0 %v988
        %997 = vmatprep.subr.bf16.mxu0 0
        %998 = vmatpush1.bf16.msra.mxu0 0
        %999 = vmatprep.subr.bf16.mxu0 0
        %1000 = vmatpush1.bf16.msra.mxu0 0
        %1001 = vmatprep.subr.bf16.mxu0 0
        %1002 = vmatpush1.bf16.msra.mxu0 0
        %1003 = vmatprep.subr.bf16.mxu0 0
        %1004 = vmatpush1.bf16.msra.mxu0 0
        %1005 = vmatprep.subr.bf16.mxu0 0
        %1006 = vmatpush1.bf16.msra.mxu0 0
        %1007 = vmatprep.subr.bf16.mxu0 0
        %1008 = vmatpush1.bf16.msra.mxu0 0
        %1009 = vmatprep.subr.bf16.mxu0 0
        %1010 = vmatpush1.bf16.msra.mxu0 0
        %1011 = vmatprep.subr.bf16.mxu0 0
        %1012 = vmatpush1.bf16.msra.mxu0 0
        %1013 = vmatprep.subr.bf16.mxu0 0
        %1014 = vmatpush1.bf16.msra.mxu0 0
        %1015 = vmatprep.subr.bf16.mxu0 0
        %1016 = vmatpush1.bf16.msra.mxu0 0
        %1017 = vmatprep.subr.bf16.mxu0 0
        %1018 = vmatpush1.bf16.msra.mxu0 0
        %1019 = vmatprep.subr.bf16.mxu0 0
        %1020 = vmatpush1.bf16.msra.mxu0 0
        %1021 = vmatprep.mubr.bf16.mxu0 0
        %1022 = vmatmul.mubr.bf16.gmra.mrb[0].mxu0 %v613
        %v1023 = vpop.f32.mrb[0].mxu0
        %v1024 = vadd.f32 0.0, %v1023
        %v1025 = vpop.f32.mrb[0].mxu0
        %v1026 = vpop.f32.mrb[0].mxu0
        %v1027 = vadd.f32 0.0, %v1026
        %v1028 = vpop.f32.mrb[0].mxu0
        %1029 = vmatprep.mubr.bf16.mxu0 0
        %1030 = vmatmul.mubr.bf16.gmra.mrb[0].mxu0 %v616
        %v1031 = vpop.f32.mrb[0].mxu0
        %v1032 = vadd.f32 0.0, %v1031
        %v1033 = vpop.f32.mrb[0].mxu0
        %v1034 = vpop.f32.mrb[0].mxu0
        %v1035 = vadd.f32 0.0, %v1034
        %v1036 = vpop.f32.mrb[0].mxu0
        %1037 = vdwg.mxu0
        %s1038 = sld [smem:[#allocation2 + $0x1]]
        %v1039 = vstv %s1038
        %v1040 = vmul.f32 %v1039, %v897
        %v1041 = vmul.f32 %v1039, %v898
        %v1042 = vmul.f32 %v1039, %v899
        %v1043 = vmul.f32 %v1039, %v900
        %v1044 = vadd.f32 %v1040, %v1024
        %v1045 = vadd.f32 %v1041, %v1027
        %v1046 = vadd.f32 %v1042, %v1032
        %v1047 = vadd.f32 %v1043, %v1035
        %s1048 = scalar_lea.vmem %s6, 128
        %v1049 = vld [vmem:[%s1048] sm:$0xff]
        %v1050 = vld [vmem:[%s1048 + $0x8] sm:$0xff]
        %v1051 = vld [vmem:[%s1048 + $0x10] sm:$0xff]
        %v1052 = vld [vmem:[%s1048 + $0x18] sm:$0xff]
        %v1053 = vld [vmem:[%s1048 + $0x20] sm:$0xff]
        %v1054 = vld [vmem:[%s1048 + $0x28] sm:$0xff]
        %v1055 = vld [vmem:[%s1048 + $0x30] sm:$0xff]
        %v1056 = vld [vmem:[%s1048 + $0x38] sm:$0xff]
        %v1057 = vld [vmem:[%s1048 + $0x40] sm:$0xff]
        %v1058 = vld [vmem:[%s1048 + $0x48] sm:$0xff]
        %v1059 = vld [vmem:[%s1048 + $0x50] sm:$0xff]
        %v1060 = vld [vmem:[%s1048 + $0x58] sm:$0xff]
        %v1061 = vld [vmem:[%s1048 + $0x60] sm:$0xff]
        %v1062 = vld [vmem:[%s1048 + $0x68] sm:$0xff]
        %v1063 = vld [vmem:[%s1048 + $0x70] sm:$0xff]
        %v1064 = vld [vmem:[%s1048 + $0x78] sm:$0xff]
        %s1065 = scalar_lea.vmem %s7, 1
        %v1066 = vld [vmem:[%s1065] sm:$0x1]
        %v1068 = vlaneseq
        %v1069 = vshrl.u32 %v1068, 7
        %v1070 = vsub.s32 0, %v1069
        %v1071 = vrot.slane %v1066, %v1070
        %1073 = vmatprep.subr.mxu0 0.0
        %1074 = vmatpush1.msra.mxu0 %v1049
        %1075 = vmatprep.subr.mxu0 0.0
        %1076 = vmatpush1.msra.mxu0 %v1050
        %1077 = vmatprep.subr.mxu0 0.0
        %1078 = vmatpush1.msra.mxu0 %v1051
        %1079 = vmatprep.subr.mxu0 0.0
        %1080 = vmatpush1.msra.mxu0 %v1052
        %1081 = vmatprep.subr.mxu0 0.0
        %1082 = vmatpush1.msra.mxu0 %v1053
        %1083 = vmatprep.subr.mxu0 0.0
        %1084 = vmatpush1.msra.mxu0 %v1054
        %1085 = vmatprep.subr.mxu0 0.0
        %1086 = vmatpush1.msra.mxu0 %v1055
        %1087 = vmatprep.subr.mxu0 0.0
        %1088 = vmatpush1.msra.mxu0 %v1056
        %1089 = vmatprep.subr.mxu0 0.0
        %1090 = vmatpush1.msra.mxu0 %v1057
        %1091 = vmatprep.subr.mxu0 0.0
        %1092 = vmatpush1.msra.mxu0 %v1058
        %1093 = vmatprep.subr.mxu0 0.0
        %1094 = vmatpush1.msra.mxu0 %v1059
        %1095 = vmatprep.subr.mxu0 0.0
        %1096 = vmatpush1.msra.mxu0 %v1060
        %1097 = vmatprep.subr.mxu0 0.0
        %1098 = vmatpush1.msra.mxu0 %v1061
        %1099 = vmatprep.subr.mxu0 0.0
        %1100 = vmatpush1.msra.mxu0 %v1062
        %1101 = vmatprep.subr.mxu0 0.0
        %1102 = vmatpush1.msra.mxu0 %v1063
        %1103 = vmatprep.subr.mxu0 0.0
        %1104 = vmatpush1.msra.mxu0 %v1064
        %1105 = vmatprep.subr.mxu0 0.0
        %1106 = vmatpush1.msra.mxu0 0.0
        %1107 = vmatprep.subr.mxu0 0.0
        %1108 = vmatpush1.msra.mxu0 0.0
        %1109 = vmatprep.subr.mxu0 0.0
        %1110 = vmatpush1.msra.mxu0 0.0
        %1111 = vmatprep.subr.mxu0 0.0
        %1112 = vmatpush1.msra.mxu0 0.0
        %1113 = vmatprep.subr.mxu0 0.0
        %1114 = vmatpush1.msra.mxu0 0.0
        %1115 = vmatprep.subr.mxu0 0.0
        %1116 = vmatpush1.msra.mxu0 0.0
        %1117 = vmatprep.subr.mxu0 0.0
        %1118 = vmatpush1.msra.mxu0 0.0
        %1119 = vmatprep.subr.mxu0 0.0
        %1120 = vmatpush1.msra.mxu0 0.0
        %1121 = vmatprep.subr.mxu0 0.0
        %1122 = vmatpush1.msra.mxu0 0.0
        %1123 = vmatprep.subr.mxu0 0.0
        %1124 = vmatpush1.msra.mxu0 0.0
        %1125 = vmatprep.subr.mxu0 0.0
        %1126 = vmatpush1.msra.mxu0 0.0
        %1127 = vmatprep.subr.mxu0 0.0
        %1128 = vmatpush1.msra.mxu0 0.0
        %1129 = vmatprep.subr.mxu0 0.0
        %1130 = vmatpush1.msra.mxu0 0.0
        %1131 = vmatprep.subr.mxu0 0.0
        %1132 = vmatpush1.msra.mxu0 0.0
        %1133 = vmatprep.subr.mxu0 0.0
        %1134 = vmatpush1.msra.mxu0 0.0
        %1135 = vmatprep.subr.mxu0 0.0
        %1136 = vmatpush1.msra.mxu0 0.0
        %1137 = vmatprep.mubr.f32.mxu0 0.0
        %1138 = vmatmul.mubr.f32.gmra.mrb[0].mxu0 %v1044
        %v1139 = vpop.f32.mrb[0].mxu0
        %v1140 = vadd.f32 %v1071, %v1139
        %v1141 = vpop.f32.mrb[0].mxu0
        %1142 = vmatprep.mubr.f32.mxu0 0.0
        %1143 = vmatmul.mubr.f32.gmra.mrb[0].mxu0 %v1045
        %v1144 = vpop.f32.mrb[0].mxu0
        %v1145 = vadd.f32 %v1071, %v1144
        %v1146 = vpop.f32.mrb[0].mxu0
        %1147 = vmatprep.mubr.f32.mxu0 0.0
        %1148 = vmatmul.mubr.f32.gmra.mrb[0].mxu0 %v1046
        %v1149 = vpop.f32.mrb[0].mxu0
        %v1150 = vadd.f32 %v1071, %v1149
        %v1151 = vpop.f32.mrb[0].mxu0
        %1152 = vmatprep.mubr.f32.mxu0 0.0
        %1153 = vmatmul.mubr.f32.gmra.mrb[0].mxu0 %v1047
        %v1154 = vpop.f32.mrb[0].mxu0
        %v1155 = vadd.f32 %v1071, %v1154
        %v1156 = vpop.f32.mrb[0].mxu0
        %1157 = vdwg.mxu0
        %v1158 = vmax.f32 %v1140, 0.0
        %v1159 = vmax.f32 %v1145, 0.0
        %v1160 = vmax.f32 %v1150, 0.0
        %v1161 = vmax.f32 %v1155, 0.0
        %s1162 = scalar_lea.vmem [#allocation5], 128
        %v1163 = vld [vmem:[%s1162] sm:$0xff]
        %v1164 = vld [vmem:[%s1162 + $0x8] sm:$0xff]
        %v1165 = vld [vmem:[%s1162 + $0x10] sm:$0xff]
        %v1166 = vld [vmem:[%s1162 + $0x18] sm:$0xff]
        %v1167 = vld [vmem:[%s1162 + $0x20] sm:$0xff]
        %v1168 = vld [vmem:[%s1162 + $0x28] sm:$0xff]
        %v1169 = vld [vmem:[%s1162 + $0x30] sm:$0xff]
        %v1170 = vld [vmem:[%s1162 + $0x38] sm:$0xff]
        %v1171 = vld [vmem:[%s1162 + $0x40] sm:$0xff]
        %v1172 = vld [vmem:[%s1162 + $0x48] sm:$0xff]
        %v1173 = vld [vmem:[%s1162 + $0x50] sm:$0xff]
        %v1174 = vld [vmem:[%s1162 + $0x58] sm:$0xff]
        %v1175 = vld [vmem:[%s1162 + $0x60] sm:$0xff]
        %v1176 = vld [vmem:[%s1162 + $0x68] sm:$0xff]
        %v1177 = vld [vmem:[%s1162 + $0x70] sm:$0xff]
        %v1178 = vld [vmem:[%s1162 + $0x78] sm:$0xff]
        %s1179 = scalar_lea.vmem %s9, 1
        %v1180 = vld [vmem:[%s1179] sm:$0x1]
        %v1182 = vlaneseq
        %v1183 = vshrl.u32 %v1182, 7
        %v1184 = vsub.s32 0, %v1183
        %v1185 = vrot.slane %v1180, %v1184
        %1187 = vmatprep.subr.mxu0 0.0
        %1188 = vmatpush1.msra.mxu0 %v1163
        %1189 = vmatprep.subr.mxu0 0.0
        %1190 = vmatpush1.msra.mxu0 %v1164
        %1191 = vmatprep.subr.mxu0 0.0
        %1192 = vmatpush1.msra.mxu0 %v1165
        %1193 = vmatprep.subr.mxu0 0.0
        %1194 = vmatpush1.msra.mxu0 %v1166
        %1195 = vmatprep.subr.mxu0 0.0
        %1196 = vmatpush1.msra.mxu0 %v1167
        %1197 = vmatprep.subr.mxu0 0.0
        %1198 = vmatpush1.msra.mxu0 %v1168
        %1199 = vmatprep.subr.mxu0 0.0
        %1200 = vmatpush1.msra.mxu0 %v1169
        %1201 = vmatprep.subr.mxu0 0.0
        %1202 = vmatpush1.msra.mxu0 %v1170
        %1203 = vmatprep.subr.mxu0 0.0
        %1204 = vmatpush1.msra.mxu0 %v1171
        %1205 = vmatprep.subr.mxu0 0.0
        %1206 = vmatpush1.msra.mxu0 %v1172
        %1207 = vmatprep.subr.mxu0 0.0
        %1208 = vmatpush1.msra.mxu0 %v1173
        %1209 = vmatprep.subr.mxu0 0.0
        %1210 = vmatpush1.msra.mxu0 %v1174
        %1211 = vmatprep.subr.mxu0 0.0
        %1212 = vmatpush1.msra.mxu0 %v1175
        %1213 = vmatprep.subr.mxu0 0.0
        %1214 = vmatpush1.msra.mxu0 %v1176
        %1215 = vmatprep.subr.mxu0 0.0
        %1216 = vmatpush1.msra.mxu0 %v1177
        %1217 = vmatprep.subr.mxu0 0.0
        %1218 = vmatpush1.msra.mxu0 %v1178
        %1219 = vmatprep.subr.mxu0 0.0
        %1220 = vmatpush1.msra.mxu0 0.0
        %1221 = vmatprep.subr.mxu0 0.0
        %1222 = vmatpush1.msra.mxu0 0.0
        %1223 = vmatprep.subr.mxu0 0.0
        %1224 = vmatpush1.msra.mxu0 0.0
        %1225 = vmatprep.subr.mxu0 0.0
        %1226 = vmatpush1.msra.mxu0 0.0
        %1227 = vmatprep.subr.mxu0 0.0
        %1228 = vmatpush1.msra.mxu0 0.0
        %1229 = vmatprep.subr.mxu0 0.0
        %1230 = vmatpush1.msra.mxu0 0.0
        %1231 = vmatprep.subr.mxu0 0.0
        %1232 = vmatpush1.msra.mxu0 0.0
        %1233 = vmatprep.subr.mxu0 0.0
        %1234 = vmatpush1.msra.mxu0 0.0
        %1235 = vmatprep.subr.mxu0 0.0
        %1236 = vmatpush1.msra.mxu0 0.0
        %1237 = vmatprep.subr.mxu0 0.0
        %1238 = vmatpush1.msra.mxu0 0.0
        %1239 = vmatprep.subr.mxu0 0.0
        %1240 = vmatpush1.msra.mxu0 0.0
        %1241 = vmatprep.subr.mxu0 0.0
        %1242 = vmatpush1.msra.mxu0 0.0
        %1243 = vmatprep.subr.mxu0 0.0
        %1244 = vmatpush1.msra.mxu0 0.0
        %1245 = vmatprep.subr.mxu0 0.0
        %1246 = vmatpush1.msra.mxu0 0.0
        %1247 = vmatprep.subr.mxu0 0.0
        %1248 = vmatpush1.msra.mxu0 0.0
        %1249 = vmatprep.subr.mxu0 0.0
        %1250 = vmatpush1.msra.mxu0 0.0
        %1251 = vmatprep.mubr.f32.mxu0 0.0
        %1252 = vmatmul.mubr.f32.gmra.mrb[0].mxu0 %v1158
        %v1253 = vpop.f32.mrb[0].mxu0
        %v1254 = vadd.f32 %v1185, %v1253
        %v1255 = vpop.f32.mrb[0].mxu0
        %1256 = vmatprep.mubr.f32.mxu0 0.0
        %1257 = vmatmul.mubr.f32.gmra.mrb[0].mxu0 %v1159
        %v1258 = vpop.f32.mrb[0].mxu0
        %v1259 = vadd.f32 %v1185, %v1258
        %v1260 = vpop.f32.mrb[0].mxu0
        %1261 = vmatprep.mubr.f32.mxu0 0.0
        %1262 = vmatmul.mubr.f32.gmra.mrb[0].mxu0 %v1160
        %v1263 = vpop.f32.mrb[0].mxu0
        %v1264 = vadd.f32 %v1185, %v1263
        %v1265 = vpop.f32.mrb[0].mxu0
        %1266 = vmatprep.mubr.f32.mxu0 0.0
        %1267 = vmatmul.mubr.f32.gmra.mrb[0].mxu0 %v1161
        %v1268 = vpop.f32.mrb[0].mxu0
        %v1269 = vadd.f32 %v1185, %v1268
        %v1270 = vpop.f32.mrb[0].mxu0
        %1271 = vdwg.mxu0
        %v1272 = vmax.f32 %v1254, 0.0
        %v1273 = vmax.f32 %v1259, 0.0
        %v1274 = vmax.f32 %v1264, 0.0
        %v1275 = vmax.f32 %v1269, 0.0
        %s1276 = scalar_lea.vmem %s459, 128
        %v1277 = vld [vmem:[%s1276] sm:$0xff]
        %v1278 = vld [vmem:[%s1276 + $0x8] sm:$0xff]
        %v1279 = vld [vmem:[%s1276 + $0x10] sm:$0xff]
        %v1280 = vld [vmem:[%s1276 + $0x18] sm:$0xff]
        %v1281 = vld [vmem:[%s1276 + $0x20] sm:$0xff]
        %v1282 = vld [vmem:[%s1276 + $0x28] sm:$0xff]
        %v1283 = vld [vmem:[%s1276 + $0x30] sm:$0xff]
        %v1284 = vld [vmem:[%s1276 + $0x38] sm:$0xff]
        %v1285 = vpack.c.bf16 %v1273, %v1272
        %v1286 = vpack.c.bf16 %v1275, %v1274
        %1287 = vmatprep.subr.bf16.mxu0 0
        %1288 = vmatpush1.bf16.msra.mxu0 %v1285
        %1289 = vmatprep.subr.bf16.mxu0 0
        %1290 = vmatpush1.bf16.msra.mxu0 %v1286
        %1291 = vmatprep.subr.bf16.mxu0 0
        %1292 = vmatpush1.bf16.msra.mxu0 0
        %1293 = vmatprep.subr.bf16.mxu0 0
        %1294 = vmatpush1.bf16.msra.mxu0 0
        %1295 = vmatprep.subr.bf16.mxu0 0
        %1296 = vmatpush1.bf16.msra.mxu0 0
        %1297 = vmatprep.subr.bf16.mxu0 0
        %1298 = vmatpush1.bf16.msra.mxu0 0
        %1299 = vmatprep.subr.bf16.mxu0 0
        %1300 = vmatpush1.bf16.msra.mxu0 0
        %1301 = vmatprep.subr.bf16.mxu0 0
        %1302 = vmatpush1.bf16.msra.mxu0 0
        %1303 = vmatprep.subr.bf16.mxu0 0
        %1304 = vmatpush1.bf16.msra.mxu0 0
        %1305 = vmatprep.subr.bf16.mxu0 0
        %1306 = vmatpush1.bf16.msra.mxu0 0
        %1307 = vmatprep.subr.bf16.mxu0 0
        %1308 = vmatpush1.bf16.msra.mxu0 0
        %1309 = vmatprep.subr.bf16.mxu0 0
        %1310 = vmatpush1.bf16.msra.mxu0 0
        %1311 = vmatprep.subr.bf16.mxu0 0
        %1312 = vmatpush1.bf16.msra.mxu0 0
        %1313 = vmatprep.subr.bf16.mxu0 0
        %1314 = vmatpush1.bf16.msra.mxu0 0
        %1315 = vmatprep.subr.bf16.mxu0 0
        %1316 = vmatpush1.bf16.msra.mxu0 0
        %1317 = vmatprep.subr.bf16.mxu0 0
        %1318 = vmatpush1.bf16.msra.mxu0 0
        %1319 = vmatprep.mubr.bf16.mxu0 0
        %1320 = vmatmul.mubr.bf16.gmra.mrb[0].mxu0 %v513
        %v1321 = vpop.f32.mrb[0].mxu0
        %v1322 = vadd.f32 %v1277, %v1321
        %v1323 = vpop.f32.mrb[0].mxu0
        %v1324 = vpop.f32.mrb[0].mxu0
        %v1325 = vadd.f32 %v1278, %v1324
        %v1326 = vpop.f32.mrb[0].mxu0
        %1327 = vmatprep.mubr.bf16.mxu0 0
        %1328 = vmatmul.mubr.bf16.gmra.mrb[0].mxu0 %v516
        %v1329 = vpop.f32.mrb[0].mxu0
        %v1330 = vadd.f32 %v1279, %v1329
        %v1331 = vpop.f32.mrb[0].mxu0
        %v1332 = vpop.f32.mrb[0].mxu0
        %v1333 = vadd.f32 %v1280, %v1332
        %v1334 = vpop.f32.mrb[0].mxu0
        %1335 = vmatprep.mubr.bf16.mxu0 0
        %1336 = vmatmul.mubr.bf16.gmra.mrb[0].mxu0 %v519
        %v1337 = vpop.f32.mrb[0].mxu0
        %v1338 = vadd.f32 %v1281, %v1337
        %v1339 = vpop.f32.mrb[0].mxu0
        %v1340 = vpop.f32.mrb[0].mxu0
        %v1341 = vadd.f32 %v1282, %v1340
        %v1342 = vpop.f32.mrb[0].mxu0
        %1343 = vmatprep.mubr.bf16.mxu0 0
        %1344 = vmatmul.mubr.bf16.gmra.mrb[0].mxu0 %v522
        %v1345 = vpop.f32.mrb[0].mxu0
        %v1346 = vadd.f32 %v1283, %v1345
        %v1347 = vpop.f32.mrb[0].mxu0
        %v1348 = vpop.f32.mrb[0].mxu0
        %v1349 = vadd.f32 %v1284, %v1348
        %v1350 = vpop.f32.mrb[0].mxu0
        %1351 = vdwg.mxu0
        %v1352 = vmax.f32 %v1322, 0.0
        %v1353 = vmax.f32 %v1325, 0.0
        %v1354 = vmax.f32 %v1330, 0.0
        %v1355 = vmax.f32 %v1333, 0.0
        %v1356 = vmax.f32 %v1338, 0.0
        %v1357 = vmax.f32 %v1341, 0.0
        %v1358 = vmax.f32 %v1346, 0.0
        %v1359 = vmax.f32 %v1349, 0.0
        %v1360 = vpack.c.bf16 %v1353, %v1352
        %v1361 = vpack.c.bf16 %v1355, %v1354
        %v1362 = vpack.c.bf16 %v1357, %v1356
        %v1363 = vpack.c.bf16 %v1359, %v1358
        %1364 = vmatprep.subr.bf16.mxu0 0
        %1365 = vmatpush1.bf16.msra.mxu0 %v1360
        %1366 = vmatprep.subr.bf16.mxu0 0
        %1367 = vmatpush1.bf16.msra.mxu0 %v1361
        %1368 = vmatprep.subr.bf16.mxu0 0
        %1369 = vmatpush1.bf16.msra.mxu0 %v1362
        %1370 = vmatprep.subr.bf16.mxu0 0
        %1371 = vmatpush1.bf16.msra.mxu0 %v1363
        %1372 = vmatprep.subr.bf16.mxu0 0
        %1373 = vmatpush1.bf16.msra.mxu0 0
        %1374 = vmatprep.subr.bf16.mxu0 0
        %1375 = vmatpush1.bf16.msra.mxu0 0
        %1376 = vmatprep.subr.bf16.mxu0 0
        %1377 = vmatpush1.bf16.msra.mxu0 0
        %1378 = vmatprep.subr.bf16.mxu0 0
        %1379 = vmatpush1.bf16.msra.mxu0 0
        %1380 = vmatprep.subr.bf16.mxu0 0
        %1381 = vmatpush1.bf16.msra.mxu0 0
        %1382 = vmatprep.subr.bf16.mxu0 0
        %1383 = vmatpush1.bf16.msra.mxu0 0
        %1384 = vmatprep.subr.bf16.mxu0 0
        %1385 = vmatpush1.bf16.msra.mxu0 0
        %1386 = vmatprep.subr.bf16.mxu0 0
        %1387 = vmatpush1.bf16.msra.mxu0 0
        %1388 = vmatprep.subr.bf16.mxu0 0
        %1389 = vmatpush1.bf16.msra.mxu0 0
        %1390 = vmatprep.subr.bf16.mxu0 0
        %1391 = vmatpush1.bf16.msra.mxu0 0
        %1392 = vmatprep.subr.bf16.mxu0 0
        %1393 = vmatpush1.bf16.msra.mxu0 0
        %1394 = vmatprep.subr.bf16.mxu0 0
        %1395 = vmatpush1.bf16.msra.mxu0 0
        %1396 = vmatprep.mubr.bf16.mxu0 0
        %1397 = vmatmul.mubr.bf16.gmra.mrb[0].mxu0 %v613
        %v1398 = vpop.f32.mrb[0].mxu0
        %v1399 = vadd.f32 0.0, %v1398
        %v1400 = vpop.f32.mrb[0].mxu0
        %v1401 = vpop.f32.mrb[0].mxu0
        %v1402 = vadd.f32 0.0, %v1401
        %v1403 = vpop.f32.mrb[0].mxu0
        %1404 = vmatprep.mubr.bf16.mxu0 0
        %1405 = vmatmul.mubr.bf16.gmra.mrb[0].mxu0 %v616
        %v1406 = vpop.f32.mrb[0].mxu0
        %v1407 = vadd.f32 0.0, %v1406
        %v1408 = vpop.f32.mrb[0].mxu0
        %v1409 = vpop.f32.mrb[0].mxu0
        %v1410 = vadd.f32 0.0, %v1409
        %v1411 = vpop.f32.mrb[0].mxu0
        %1412 = vdwg.mxu0
        %s1413 = sld [smem:[#allocation2 + $0x2]]
        %v1414 = vstv %s1413
        %v1415 = vmul.f32 %v1414, %v1272
        %v1416 = vmul.f32 %v1414, %v1273
        %v1417 = vmul.f32 %v1414, %v1274
        %v1418 = vmul.f32 %v1414, %v1275
        %v1419 = vadd.f32 %v1415, %v1399
        %v1420 = vadd.f32 %v1416, %v1402
        %v1421 = vadd.f32 %v1417, %v1407
        %v1422 = vadd.f32 %v1418, %v1410
        %s1423 = scalar_lea.vmem %s6, 256
        %v1424 = vld [vmem:[%s1423] sm:$0xff]
        %v1425 = vld [vmem:[%s1423 + $0x8] sm:$0xff]
        %v1426 = vld [vmem:[%s1423 + $0x10] sm:$0xff]
        %v1427 = vld [vmem:[%s1423 + $0x18] sm:$0xff]
        %v1428 = vld [vmem:[%s1423 + $0x20] sm:$0xff]
        %v1429 = vld [vmem:[%s1423 + $0x28] sm:$0xff]
        %v1430 = vld [vmem:[%s1423 + $0x30] sm:$0xff]
        %v1431 = vld [vmem:[%s1423 + $0x38] sm:$0xff]
        %v1432 = vld [vmem:[%s1423 + $0x40] sm:$0xff]
        %v1433 = vld [vmem:[%s1423 + $0x48] sm:$0xff]
        %v1434 = vld [vmem:[%s1423 + $0x50] sm:$0xff]
        %v1435 = vld [vmem:[%s1423 + $0x58] sm:$0xff]
        %v1436 = vld [vmem:[%s1423 + $0x60] sm:$0xff]
        %v1437 = vld [vmem:[%s1423 + $0x68] sm:$0xff]
        %v1438 = vld [vmem:[%s1423 + $0x70] sm:$0xff]
        %v1439 = vld [vmem:[%s1423 + $0x78] sm:$0xff]
        %s1440 = scalar_lea.vmem %s7, 2
        %v1441 = vld [vmem:[%s1440] sm:$0x1]
        %v1443 = vlaneseq
        %v1444 = vshrl.u32 %v1443, 7
        %v1445 = vsub.s32 0, %v1444
        %v1446 = vrot.slane %v1441, %v1445
        %1448 = vmatprep.subr.mxu0 0.0
        %1449 = vmatpush1.msra.mxu0 %v1424
        %1450 = vmatprep.subr.mxu0 0.0
        %1451 = vmatpush1.msra.mxu0 %v1425
        %1452 = vmatprep.subr.mxu0 0.0
        %1453 = vmatpush1.msra.mxu0 %v1426
        %1454 = vmatprep.subr.mxu0 0.0
        %1455 = vmatpush1.msra.mxu0 %v1427
        %1456 = vmatprep.subr.mxu0 0.0
        %1457 = vmatpush1.msra.mxu0 %v1428
        %1458 = vmatprep.subr.mxu0 0.0
        %1459 = vmatpush1.msra.mxu0 %v1429
        %1460 = vmatprep.subr.mxu0 0.0
        %1461 = vmatpush1.msra.mxu0 %v1430
        %1462 = vmatprep.subr.mxu0 0.0
        %1463 = vmatpush1.msra.mxu0 %v1431
        %1464 = vmatprep.subr.mxu0 0.0
        %1465 = vmatpush1.msra.mxu0 %v1432
        %1466 = vmatprep.subr.mxu0 0.0
        %1467 = vmatpush1.msra.mxu0 %v1433
        %1468 = vmatprep.subr.mxu0 0.0
        %1469 = vmatpush1.msra.mxu0 %v1434
        %1470 = vmatprep.subr.mxu0 0.0
        %1471 = vmatpush1.msra.mxu0 %v1435
        %1472 = vmatprep.subr.mxu0 0.0
        %1473 = vmatpush1.msra.mxu0 %v1436
        %1474 = vmatprep.subr.mxu0 0.0
        %1475 = vmatpush1.msra.mxu0 %v1437
        %1476 = vmatprep.subr.mxu0 0.0
        %1477 = vmatpush1.msra.mxu0 %v1438
        %1478 = vmatprep.subr.mxu0 0.0
        %1479 = vmatpush1.msra.mxu0 %v1439
        %1480 = vmatprep.subr.mxu0 0.0
        %1481 = vmatpush1.msra.mxu0 0.0
        %1482 = vmatprep.subr.mxu0 0.0
        %1483 = vmatpush1.msra.mxu0 0.0
        %1484 = vmatprep.subr.mxu0 0.0
        %1485 = vmatpush1.msra.mxu0 0.0
        %1486 = vmatprep.subr.mxu0 0.0
        %1487 = vmatpush1.msra.mxu0 0.0
        %1488 = vmatprep.subr.mxu0 0.0
        %1489 = vmatpush1.msra.mxu0 0.0
        %1490 = vmatprep.subr.mxu0 0.0
        %1491 = vmatpush1.msra.mxu0 0.0
        %1492 = vmatprep.subr.mxu0 0.0
        %1493 = vmatpush1.msra.mxu0 0.0
        %1494 = vmatprep.subr.mxu0 0.0
        %1495 = vmatpush1.msra.mxu0 0.0
        %1496 = vmatprep.subr.mxu0 0.0
        %1497 = vmatpush1.msra.mxu0 0.0
        %1498 = vmatprep.subr.mxu0 0.0
        %1499 = vmatpush1.msra.mxu0 0.0
        %1500 = vmatprep.subr.mxu0 0.0
        %1501 = vmatpush1.msra.mxu0 0.0
        %1502 = vmatprep.subr.mxu0 0.0
        %1503 = vmatpush1.msra.mxu0 0.0
        %1504 = vmatprep.subr.mxu0 0.0
        %1505 = vmatpush1.msra.mxu0 0.0
        %1506 = vmatprep.subr.mxu0 0.0
        %1507 = vmatpush1.msra.mxu0 0.0
        %1508 = vmatprep.subr.mxu0 0.0
        %1509 = vmatpush1.msra.mxu0 0.0
        %1510 = vmatprep.subr.mxu0 0.0
        %1511 = vmatpush1.msra.mxu0 0.0
        %1512 = vmatprep.mubr.f32.mxu0 0.0
        %1513 = vmatmul.mubr.f32.gmra.mrb[0].mxu0 %v1419
        %v1514 = vpop.f32.mrb[0].mxu0
        %v1515 = vadd.f32 %v1446, %v1514
        %v1516 = vpop.f32.mrb[0].mxu0
        %1517 = vmatprep.mubr.f32.mxu0 0.0
        %1518 = vmatmul.mubr.f32.gmra.mrb[0].mxu0 %v1420
        %v1519 = vpop.f32.mrb[0].mxu0
        %v1520 = vadd.f32 %v1446, %v1519
        %v1521 = vpop.f32.mrb[0].mxu0
        %1522 = vmatprep.mubr.f32.mxu0 0.0
        %1523 = vmatmul.mubr.f32.gmra.mrb[0].mxu0 %v1421
        %v1524 = vpop.f32.mrb[0].mxu0
        %v1525 = vadd.f32 %v1446, %v1524
        %v1526 = vpop.f32.mrb[0].mxu0
        %1527 = vmatprep.mubr.f32.mxu0 0.0
        %1528 = vmatmul.mubr.f32.gmra.mrb[0].mxu0 %v1422
        %v1529 = vpop.f32.mrb[0].mxu0
        %v1530 = vadd.f32 %v1446, %v1529
        %v1531 = vpop.f32.mrb[0].mxu0
        %1532 = vdwg.mxu0
        %v1533 = vmax.f32 %v1515, 0.0
        %v1534 = vmax.f32 %v1520, 0.0
        %v1535 = vmax.f32 %v1525, 0.0
        %v1536 = vmax.f32 %v1530, 0.0
        %s1537 = scalar_lea.vmem [#allocation5], 256
        %v1538 = vld [vmem:[%s1537] sm:$0xff]
        %v1539 = vld [vmem:[%s1537 + $0x8] sm:$0xff]
        %v1540 = vld [vmem:[%s1537 + $0x10] sm:$0xff]
        %v1541 = vld [vmem:[%s1537 + $0x18] sm:$0xff]
        %v1542 = vld [vmem:[%s1537 + $0x20] sm:$0xff]
        %v1543 = vld [vmem:[%s1537 + $0x28] sm:$0xff]
        %v1544 = vld [vmem:[%s1537 + $0x30] sm:$0xff]
        %v1545 = vld [vmem:[%s1537 + $0x38] sm:$0xff]
        %v1546 = vld [vmem:[%s1537 + $0x40] sm:$0xff]
        %v1547 = vld [vmem:[%s1537 + $0x48] sm:$0xff]
        %v1548 = vld [vmem:[%s1537 + $0x50] sm:$0xff]
        %v1549 = vld [vmem:[%s1537 + $0x58] sm:$0xff]
        %v1550 = vld [vmem:[%s1537 + $0x60] sm:$0xff]
        %v1551 = vld [vmem:[%s1537 + $0x68] sm:$0xff]
        %v1552 = vld [vmem:[%s1537 + $0x70] sm:$0xff]
        %v1553 = vld [vmem:[%s1537 + $0x78] sm:$0xff]
        %s1554 = scalar_lea.vmem %s9, 2
        %v1555 = vld [vmem:[%s1554] sm:$0x1]
        %v1557 = vlaneseq
        %v1558 = vshrl.u32 %v1557, 7
        %v1559 = vsub.s32 0, %v1558
        %v1560 = vrot.slane %v1555, %v1559
        %1562 = vmatprep.subr.mxu0 0.0
        %1563 = vmatpush1.msra.mxu0 %v1538
        %1564 = vmatprep.subr.mxu0 0.0
        %1565 = vmatpush1.msra.mxu0 %v1539
        %1566 = vmatprep.subr.mxu0 0.0
        %1567 = vmatpush1.msra.mxu0 %v1540
        %1568 = vmatprep.subr.mxu0 0.0
        %1569 = vmatpush1.msra.mxu0 %v1541
        %1570 = vmatprep.subr.mxu0 0.0
        %1571 = vmatpush1.msra.mxu0 %v1542
        %1572 = vmatprep.subr.mxu0 0.0
        %1573 = vmatpush1.msra.mxu0 %v1543
        %1574 = vmatprep.subr.mxu0 0.0
        %1575 = vmatpush1.msra.mxu0 %v1544
        %1576 = vmatprep.subr.mxu0 0.0
        %1577 = vmatpush1.msra.mxu0 %v1545
        %1578 = vmatprep.subr.mxu0 0.0
        %1579 = vmatpush1.msra.mxu0 %v1546
        %1580 = vmatprep.subr.mxu0 0.0
        %1581 = vmatpush1.msra.mxu0 %v1547
        %1582 = vmatprep.subr.mxu0 0.0
        %1583 = vmatpush1.msra.mxu0 %v1548
        %1584 = vmatprep.subr.mxu0 0.0
        %1585 = vmatpush1.msra.mxu0 %v1549
        %1586 = vmatprep.subr.mxu0 0.0
        %1587 = vmatpush1.msra.mxu0 %v1550
        %1588 = vmatprep.subr.mxu0 0.0
        %1589 = vmatpush1.msra.mxu0 %v1551
        %1590 = vmatprep.subr.mxu0 0.0
        %1591 = vmatpush1.msra.mxu0 %v1552
        %1592 = vmatprep.subr.mxu0 0.0
        %1593 = vmatpush1.msra.mxu0 %v1553
        %1594 = vmatprep.subr.mxu0 0.0
        %1595 = vmatpush1.msra.mxu0 0.0
        %1596 = vmatprep.subr.mxu0 0.0
        %1597 = vmatpush1.msra.mxu0 0.0
        %1598 = vmatprep.subr.mxu0 0.0
        %1599 = vmatpush1.msra.mxu0 0.0
        %1600 = vmatprep.subr.mxu0 0.0
        %1601 = vmatpush1.msra.mxu0 0.0
        %1602 = vmatprep.subr.mxu0 0.0
        %1603 = vmatpush1.msra.mxu0 0.0
        %1604 = vmatprep.subr.mxu0 0.0
        %1605 = vmatpush1.msra.mxu0 0.0
        %1606 = vmatprep.subr.mxu0 0.0
        %1607 = vmatpush1.msra.mxu0 0.0
        %1608 = vmatprep.subr.mxu0 0.0
        %1609 = vmatpush1.msra.mxu0 0.0
        %1610 = vmatprep.subr.mxu0 0.0
        %1611 = vmatpush1.msra.mxu0 0.0
        %1612 = vmatprep.subr.mxu0 0.0
        %1613 = vmatpush1.msra.mxu0 0.0
        %1614 = vmatprep.subr.mxu0 0.0
        %1615 = vmatpush1.msra.mxu0 0.0
        %1616 = vmatprep.subr.mxu0 0.0
        %1617 = vmatpush1.msra.mxu0 0.0
        %1618 = vmatprep.subr.mxu0 0.0
        %1619 = vmatpush1.msra.mxu0 0.0
        %1620 = vmatprep.subr.mxu0 0.0
        %1621 = vmatpush1.msra.mxu0 0.0
        %1622 = vmatprep.subr.mxu0 0.0
        %1623 = vmatpush1.msra.mxu0 0.0
        %1624 = vmatprep.subr.mxu0 0.0
        %1625 = vmatpush1.msra.mxu0 0.0
        %1626 = vmatprep.mubr.f32.mxu0 0.0
        %1627 = vmatmul.mubr.f32.gmra.mrb[0].mxu0 %v1533
        %v1628 = vpop.f32.mrb[0].mxu0
        %v1629 = vadd.f32 %v1560, %v1628
        %v1630 = vpop.f32.mrb[0].mxu0
        %1631 = vmatprep.mubr.f32.mxu0 0.0
        %1632 = vmatmul.mubr.f32.gmra.mrb[0].mxu0 %v1534
        %v1633 = vpop.f32.mrb[0].mxu0
        %v1634 = vadd.f32 %v1560, %v1633
        %v1635 = vpop.f32.mrb[0].mxu0
        %1636 = vmatprep.mubr.f32.mxu0 0.0
        %1637 = vmatmul.mubr.f32.gmra.mrb[0].mxu0 %v1535
        %v1638 = vpop.f32.mrb[0].mxu0
        %v1639 = vadd.f32 %v1560, %v1638
        %v1640 = vpop.f32.mrb[0].mxu0
        %1641 = vmatprep.mubr.f32.mxu0 0.0
        %1642 = vmatmul.mubr.f32.gmra.mrb[0].mxu0 %v1536
        %v1643 = vpop.f32.mrb[0].mxu0
        %v1644 = vadd.f32 %v1560, %v1643
        %v1645 = vpop.f32.mrb[0].mxu0
        %1646 = vdwg.mxu0
        %v1647 = vmax.f32 %v1629, 0.0
        %v1648 = vmax.f32 %v1634, 0.0
        %v1649 = vmax.f32 %v1639, 0.0
        %v1650 = vmax.f32 %v1644, 0.0
        %s1651 = scalar_lea.vmem %s459, 192
        %v1652 = vld [vmem:[%s1651] sm:$0xff]
        %v1653 = vld [vmem:[%s1651 + $0x8] sm:$0xff]
        %v1654 = vld [vmem:[%s1651 + $0x10] sm:$0xff]
        %v1655 = vld [vmem:[%s1651 + $0x18] sm:$0xff]
        %v1656 = vld [vmem:[%s1651 + $0x20] sm:$0xff]
        %v1657 = vld [vmem:[%s1651 + $0x28] sm:$0xff]
        %v1658 = vld [vmem:[%s1651 + $0x30] sm:$0xff]
        %v1659 = vld [vmem:[%s1651 + $0x38] sm:$0xff]
        %v1660 = vpack.c.bf16 %v1648, %v1647
        %v1661 = vpack.c.bf16 %v1650, %v1649
        %1662 = vmatprep.subr.bf16.mxu0 0
        %1663 = vmatpush1.bf16.msra.mxu0 %v1660
        %1664 = vmatprep.subr.bf16.mxu0 0
        %1665 = vmatpush1.bf16.msra.mxu0 %v1661
        %1666 = vmatprep.subr.bf16.mxu0 0
        %1667 = vmatpush1.bf16.msra.mxu0 0
        %1668 = vmatprep.subr.bf16.mxu0 0
        %1669 = vmatpush1.bf16.msra.mxu0 0
        %1670 = vmatprep.subr.bf16.mxu0 0
        %1671 = vmatpush1.bf16.msra.mxu0 0
        %1672 = vmatprep.subr.bf16.mxu0 0
        %1673 = vmatpush1.bf16.msra.mxu0 0
        %1674 = vmatprep.subr.bf16.mxu0 0
        %1675 = vmatpush1.bf16.msra.mxu0 0
        %1676 = vmatprep.subr.bf16.mxu0 0
        %1677 = vmatpush1.bf16.msra.mxu0 0
        %1678 = vmatprep.subr.bf16.mxu0 0
        %1679 = vmatpush1.bf16.msra.mxu0 0
        %1680 = vmatprep.subr.bf16.mxu0 0
        %1681 = vmatpush1.bf16.msra.mxu0 0
        %1682 = vmatprep.subr.bf16.mxu0 0
        %1683 = vmatpush1.bf16.msra.mxu0 0
        %1684 = vmatprep.subr.bf16.mxu0 0
        %1685 = vmatpush1.bf16.msra.mxu0 0
        %1686 = vmatprep.subr.bf16.mxu0 0
        %1687 = vmatpush1.bf16.msra.mxu0 0
        %1688 = vmatprep.subr.bf16.mxu0 0
        %1689 = vmatpush1.bf16.msra.mxu0 0
        %1690 = vmatprep.subr.bf16.mxu0 0
        %1691 = vmatpush1.bf16.msra.mxu0 0
        %1692 = vmatprep.subr.bf16.mxu0 0
        %1693 = vmatpush1.bf16.msra.mxu0 0
        %1694 = vmatprep.mubr.bf16.mxu0 0
        %1695 = vmatmul.mubr.bf16.gmra.mrb[0].mxu0 %v513
        %v1696 = vpop.f32.mrb[0].mxu0
        %v1697 = vadd.f32 %v1652, %v1696
        %v1698 = vpop.f32.mrb[0].mxu0
        %v1699 = vpop.f32.mrb[0].mxu0
        %v1700 = vadd.f32 %v1653, %v1699
        %v1701 = vpop.f32.mrb[0].mxu0
        %1702 = vmatprep.mubr.bf16.mxu0 0
        %1703 = vmatmul.mubr.bf16.gmra.mrb[0].mxu0 %v516
        %v1704 = vpop.f32.mrb[0].mxu0
        %v1705 = vadd.f32 %v1654, %v1704
        %v1706 = vpop.f32.mrb[0].mxu0
        %v1707 = vpop.f32.mrb[0].mxu0
        %v1708 = vadd.f32 %v1655, %v1707
        %v1709 = vpop.f32.mrb[0].mxu0
        %1710 = vmatprep.mubr.bf16.mxu0 0
        %1711 = vmatmul.mubr.bf16.gmra.mrb[0].mxu0 %v519
        %v1712 = vpop.f32.mrb[0].mxu0
        %v1713 = vadd.f32 %v1656, %v1712
        %v1714 = vpop.f32.mrb[0].mxu0
        %v1715 = vpop.f32.mrb[0].mxu0
        %v1716 = vadd.f32 %v1657, %v1715
        %v1717 = vpop.f32.mrb[0].mxu0
        %1718 = vmatprep.mubr.bf16.mxu0 0
        %1719 = vmatmul.mubr.bf16.gmra.mrb[0].mxu0 %v522
        %v1720 = vpop.f32.mrb[0].mxu0
        %v1721 = vadd.f32 %v1658, %v1720
        %v1722 = vpop.f32.mrb[0].mxu0
        %v1723 = vpop.f32.mrb[0].mxu0
        %v1724 = vadd.f32 %v1659, %v1723
        %v1725 = vpop.f32.mrb[0].mxu0
        %1726 = vdwg.mxu0
        %v1727 = vmax.f32 %v1697, 0.0
        %v1728 = vmax.f32 %v1700, 0.0
        %v1729 = vmax.f32 %v1705, 0.0
        %v1730 = vmax.f32 %v1708, 0.0
        %v1731 = vmax.f32 %v1713, 0.0
        %v1732 = vmax.f32 %v1716, 0.0
        %v1733 = vmax.f32 %v1721, 0.0
        %v1734 = vmax.f32 %v1724, 0.0
        %v1735 = vpack.c.bf16 %v1728, %v1727
        %v1736 = vpack.c.bf16 %v1730, %v1729
        %v1737 = vpack.c.bf16 %v1732, %v1731
        %v1738 = vpack.c.bf16 %v1734, %v1733
        %1739 = vmatprep.subr.bf16.mxu0 0
        %1740 = vmatpush1.bf16.msra.mxu0 %v1735
        %1741 = vmatprep.subr.bf16.mxu0 0
        %1742 = vmatpush1.bf16.msra.mxu0 %v1736
        %1743 = vmatprep.subr.bf16.mxu0 0
        %1744 = vmatpush1.bf16.msra.mxu0 %v1737
        %1745 = vmatprep.subr.bf16.mxu0 0
        %1746 = vmatpush1.bf16.msra.mxu0 %v1738
        %1747 = vmatprep.subr.bf16.mxu0 0
        %1748 = vmatpush1.bf16.msra.mxu0 0
        %1749 = vmatprep.subr.bf16.mxu0 0
        %1750 = vmatpush1.bf16.msra.mxu0 0
        %1751 = vmatprep.subr.bf16.mxu0 0
        %1752 = vmatpush1.bf16.msra.mxu0 0
        %1753 = vmatprep.subr.bf16.mxu0 0
        %1754 = vmatpush1.bf16.msra.mxu0 0
        %1755 = vmatprep.subr.bf16.mxu0 0
        %1756 = vmatpush1.bf16.msra.mxu0 0
        %1757 = vmatprep.subr.bf16.mxu0 0
        %1758 = vmatpush1.bf16.msra.mxu0 0
        %1759 = vmatprep.subr.bf16.mxu0 0
        %1760 = vmatpush1.bf16.msra.mxu0 0
        %1761 = vmatprep.subr.bf16.mxu0 0
        %1762 = vmatpush1.bf16.msra.mxu0 0
        %1763 = vmatprep.subr.bf16.mxu0 0
        %1764 = vmatpush1.bf16.msra.mxu0 0
        %1765 = vmatprep.subr.bf16.mxu0 0
        %1766 = vmatpush1.bf16.msra.mxu0 0
        %1767 = vmatprep.subr.bf16.mxu0 0
        %1768 = vmatpush1.bf16.msra.mxu0 0
        %1769 = vmatprep.subr.bf16.mxu0 0
        %1770 = vmatpush1.bf16.msra.mxu0 0
        %1771 = vmatprep.mubr.bf16.mxu0 0
        %1772 = vmatmul.mubr.bf16.gmra.mrb[0].mxu0 %v613
        %v1773 = vpop.f32.mrb[0].mxu0
        %v1774 = vadd.f32 0.0, %v1773
        %v1775 = vpop.f32.mrb[0].mxu0
        %v1776 = vpop.f32.mrb[0].mxu0
        %v1777 = vadd.f32 0.0, %v1776
        %v1778 = vpop.f32.mrb[0].mxu0
        %1779 = vmatprep.mubr.bf16.mxu0 0
        %1780 = vmatmul.mubr.bf16.gmra.mrb[0].mxu0 %v616
        %v1781 = vpop.f32.mrb[0].mxu0
        %v1782 = vadd.f32 0.0, %v1781
        %v1783 = vpop.f32.mrb[0].mxu0
        %v1784 = vpop.f32.mrb[0].mxu0
        %v1785 = vadd.f32 0.0, %v1784
        %v1786 = vpop.f32.mrb[0].mxu0
        %1787 = vdwg.mxu0
        %s1788 = sld [smem:[#allocation2 + $0x3]]
        %v1789 = vstv %s1788
        %v1790 = vmul.f32 %v1789, %v1647
        %v1791 = vmul.f32 %v1789, %v1648
        %v1792 = vmul.f32 %v1789, %v1649
        %v1793 = vmul.f32 %v1789, %v1650
        %v1794 = vadd.f32 %v1790, %v1774
        %v1795 = vadd.f32 %v1791, %v1777
        %v1796 = vadd.f32 %v1792, %v1782
        %v1797 = vadd.f32 %v1793, %v1785
        %s1798 = scalar_lea.vmem %s6, 384
        %v1799 = vld [vmem:[%s1798] sm:$0xff]
        %v1800 = vld [vmem:[%s1798 + $0x8] sm:$0xff]
        %v1801 = vld [vmem:[%s1798 + $0x10] sm:$0xff]
        %v1802 = vld [vmem:[%s1798 + $0x18] sm:$0xff]
        %v1803 = vld [vmem:[%s1798 + $0x20] sm:$0xff]
        %v1804 = vld [vmem:[%s1798 + $0x28] sm:$0xff]
        %v1805 = vld [vmem:[%s1798 + $0x30] sm:$0xff]
        %v1806 = vld [vmem:[%s1798 + $0x38] sm:$0xff]
        %v1807 = vld [vmem:[%s1798 + $0x40] sm:$0xff]
        %v1808 = vld [vmem:[%s1798 + $0x48] sm:$0xff]
        %v1809 = vld [vmem:[%s1798 + $0x50] sm:$0xff]
        %v1810 = vld [vmem:[%s1798 + $0x58] sm:$0xff]
        %v1811 = vld [vmem:[%s1798 + $0x60] sm:$0xff]
        %v1812 = vld [vmem:[%s1798 + $0x68] sm:$0xff]
        %v1813 = vld [vmem:[%s1798 + $0x70] sm:$0xff]
        %v1814 = vld [vmem:[%s1798 + $0x78] sm:$0xff]
        %s1815 = scalar_lea.vmem %s7, 3
        %v1816 = vld [vmem:[%s1815] sm:$0x1]
        %v1818 = vlaneseq
        %v1819 = vshrl.u32 %v1818, 7
        %v1820 = vsub.s32 0, %v1819
        %v1821 = vrot.slane %v1816, %v1820
        %1823 = vmatprep.subr.mxu0 0.0
        %1824 = vmatpush1.msra.mxu0 %v1799
        %1825 = vmatprep.subr.mxu0 0.0
        %1826 = vmatpush1.msra.mxu0 %v1800
        %1827 = vmatprep.subr.mxu0 0.0
        %1828 = vmatpush1.msra.mxu0 %v1801
        %1829 = vmatprep.subr.mxu0 0.0
        %1830 = vmatpush1.msra.mxu0 %v1802
        %1831 = vmatprep.subr.mxu0 0.0
        %1832 = vmatpush1.msra.mxu0 %v1803
        %1833 = vmatprep.subr.mxu0 0.0
        %1834 = vmatpush1.msra.mxu0 %v1804
        %1835 = vmatprep.subr.mxu0 0.0
        %1836 = vmatpush1.msra.mxu0 %v1805
        %1837 = vmatprep.subr.mxu0 0.0
        %1838 = vmatpush1.msra.mxu0 %v1806
        %1839 = vmatprep.subr.mxu0 0.0
        %1840 = vmatpush1.msra.mxu0 %v1807
        %1841 = vmatprep.subr.mxu0 0.0
        %1842 = vmatpush1.msra.mxu0 %v1808
        %1843 = vmatprep.subr.mxu0 0.0
        %1844 = vmatpush1.msra.mxu0 %v1809
        %1845 = vmatprep.subr.mxu0 0.0
        %1846 = vmatpush1.msra.mxu0 %v1810
        %1847 = vmatprep.subr.mxu0 0.0
        %1848 = vmatpush1.msra.mxu0 %v1811
        %1849 = vmatprep.subr.mxu0 0.0
        %1850 = vmatpush1.msra.mxu0 %v1812
        %1851 = vmatprep.subr.mxu0 0.0
        %1852 = vmatpush1.msra.mxu0 %v1813
        %1853 = vmatprep.subr.mxu0 0.0
        %1854 = vmatpush1.msra.mxu0 %v1814
        %1855 = vmatprep.subr.mxu0 0.0
        %1856 = vmatpush1.msra.mxu0 0.0
        %1857 = vmatprep.subr.mxu0 0.0
        %1858 = vmatpush1.msra.mxu0 0.0
        %1859 = vmatprep.subr.mxu0 0.0
        %1860 = vmatpush1.msra.mxu0 0.0
        %1861 = vmatprep.subr.mxu0 0.0
        %1862 = vmatpush1.msra.mxu0 0.0
        %1863 = vmatprep.subr.mxu0 0.0
        %1864 = vmatpush1.msra.mxu0 0.0
        %1865 = vmatprep.subr.mxu0 0.0
        %1866 = vmatpush1.msra.mxu0 0.0
        %1867 = vmatprep.subr.mxu0 0.0
        %1868 = vmatpush1.msra.mxu0 0.0
        %1869 = vmatprep.subr.mxu0 0.0
        %1870 = vmatpush1.msra.mxu0 0.0
        %1871 = vmatprep.subr.mxu0 0.0
        %1872 = vmatpush1.msra.mxu0 0.0
        %1873 = vmatprep.subr.mxu0 0.0
        %1874 = vmatpush1.msra.mxu0 0.0
        %1875 = vmatprep.subr.mxu0 0.0
        %1876 = vmatpush1.msra.mxu0 0.0
        %1877 = vmatprep.subr.mxu0 0.0
        %1878 = vmatpush1.msra.mxu0 0.0
        %1879 = vmatprep.subr.mxu0 0.0
        %1880 = vmatpush1.msra.mxu0 0.0
        %1881 = vmatprep.subr.mxu0 0.0
        %1882 = vmatpush1.msra.mxu0 0.0
        %1883 = vmatprep.subr.mxu0 0.0
        %1884 = vmatpush1.msra.mxu0 0.0
        %1885 = vmatprep.subr.mxu0 0.0
        %1886 = vmatpush1.msra.mxu0 0.0
        %1887 = vmatprep.mubr.f32.mxu0 0.0
        %1888 = vmatmul.mubr.f32.gmra.mrb[0].mxu0 %v1794
        %v1889 = vpop.f32.mrb[0].mxu0
        %v1890 = vadd.f32 %v1821, %v1889
        %v1891 = vpop.f32.mrb[0].mxu0
        %1892 = vmatprep.mubr.f32.mxu0 0.0
        %1893 = vmatmul.mubr.f32.gmra.mrb[0].mxu0 %v1795
        %v1894 = vpop.f32.mrb[0].mxu0
        %v1895 = vadd.f32 %v1821, %v1894
        %v1896 = vpop.f32.mrb[0].mxu0
        %1897 = vmatprep.mubr.f32.mxu0 0.0
        %1898 = vmatmul.mubr.f32.gmra.mrb[0].mxu0 %v1796
        %v1899 = vpop.f32.mrb[0].mxu0
        %v1900 = vadd.f32 %v1821, %v1899
        %v1901 = vpop.f32.mrb[0].mxu0
        %1902 = vmatprep.mubr.f32.mxu0 0.0
        %1903 = vmatmul.mubr.f32.gmra.mrb[0].mxu0 %v1797
        %v1904 = vpop.f32.mrb[0].mxu0
        %v1905 = vadd.f32 %v1821, %v1904
        %v1906 = vpop.f32.mrb[0].mxu0
        %1907 = vdwg.mxu0
        %v1908 = vmax.f32 %v1890, 0.0
        %v1909 = vmax.f32 %v1895, 0.0
        %v1910 = vmax.f32 %v1900, 0.0
        %v1911 = vmax.f32 %v1905, 0.0
        %s1912 = scalar_lea.vmem [#allocation5], 384
        %v1913 = vld [vmem:[%s1912] sm:$0xff]
        %v1914 = vld [vmem:[%s1912 + $0x8] sm:$0xff]
        %v1915 = vld [vmem:[%s1912 + $0x10] sm:$0xff]
        %v1916 = vld [vmem:[%s1912 + $0x18] sm:$0xff]
        %v1917 = vld [vmem:[%s1912 + $0x20] sm:$0xff]
        %v1918 = vld [vmem:[%s1912 + $0x28] sm:$0xff]
        %v1919 = vld [vmem:[%s1912 + $0x30] sm:$0xff]
        %v1920 = vld [vmem:[%s1912 + $0x38] sm:$0xff]
        %v1921 = vld [vmem:[%s1912 + $0x40] sm:$0xff]
        %v1922 = vld [vmem:[%s1912 + $0x48] sm:$0xff]
        %v1923 = vld [vmem:[%s1912 + $0x50] sm:$0xff]
        %v1924 = vld [vmem:[%s1912 + $0x58] sm:$0xff]
        %v1925 = vld [vmem:[%s1912 + $0x60] sm:$0xff]
        %v1926 = vld [vmem:[%s1912 + $0x68] sm:$0xff]
        %v1927 = vld [vmem:[%s1912 + $0x70] sm:$0xff]
        %v1928 = vld [vmem:[%s1912 + $0x78] sm:$0xff]
        %s1929 = scalar_lea.vmem %s9, 3
        %v1930 = vld [vmem:[%s1929] sm:$0x1]
        %v1932 = vlaneseq
        %v1933 = vshrl.u32 %v1932, 7
        %v1934 = vsub.s32 0, %v1933
        %v1935 = vrot.slane %v1930, %v1934
        %1937 = vmatprep.subr.mxu0 0.0
        %1938 = vmatpush1.msra.mxu0 %v1913
        %1939 = vmatprep.subr.mxu0 0.0
        %1940 = vmatpush1.msra.mxu0 %v1914
        %1941 = vmatprep.subr.mxu0 0.0
        %1942 = vmatpush1.msra.mxu0 %v1915
        %1943 = vmatprep.subr.mxu0 0.0
        %1944 = vmatpush1.msra.mxu0 %v1916
        %1945 = vmatprep.subr.mxu0 0.0
        %1946 = vmatpush1.msra.mxu0 %v1917
        %1947 = vmatprep.subr.mxu0 0.0
        %1948 = vmatpush1.msra.mxu0 %v1918
        %1949 = vmatprep.subr.mxu0 0.0
        %1950 = vmatpush1.msra.mxu0 %v1919
        %1951 = vmatprep.subr.mxu0 0.0
        %1952 = vmatpush1.msra.mxu0 %v1920
        %1953 = vmatprep.subr.mxu0 0.0
        %1954 = vmatpush1.msra.mxu0 %v1921
        %1955 = vmatprep.subr.mxu0 0.0
        %1956 = vmatpush1.msra.mxu0 %v1922
        %1957 = vmatprep.subr.mxu0 0.0
        %1958 = vmatpush1.msra.mxu0 %v1923
        %1959 = vmatprep.subr.mxu0 0.0
        %1960 = vmatpush1.msra.mxu0 %v1924
        %1961 = vmatprep.subr.mxu0 0.0
        %1962 = vmatpush1.msra.mxu0 %v1925
        %1963 = vmatprep.subr.mxu0 0.0
        %1964 = vmatpush1.msra.mxu0 %v1926
        %1965 = vmatprep.subr.mxu0 0.0
        %1966 = vmatpush1.msra.mxu0 %v1927
        %1967 = vmatprep.subr.mxu0 0.0
        %1968 = vmatpush1.msra.mxu0 %v1928
        %1969 = vmatprep.subr.mxu0 0.0
        %1970 = vmatpush1.msra.mxu0 0.0
        %1971 = vmatprep.subr.mxu0 0.0
        %1972 = vmatpush1.msra.mxu0 0.0
        %1973 = vmatprep.subr.mxu0 0.0
        %1974 = vmatpush1.msra.mxu0 0.0
        %1975 = vmatprep.subr.mxu0 0.0
        %1976 = vmatpush1.msra.mxu0 0.0
        %1977 = vmatprep.subr.mxu0 0.0
        %1978 = vmatpush1.msra.mxu0 0.0
        %1979 = vmatprep.subr.mxu0 0.0
        %1980 = vmatpush1.msra.mxu0 0.0
        %1981 = vmatprep.subr.mxu0 0.0
        %1982 = vmatpush1.msra.mxu0 0.0
        %1983 = vmatprep.subr.mxu0 0.0
        %1984 = vmatpush1.msra.mxu0 0.0
        %1985 = vmatprep.subr.mxu0 0.0
        %1986 = vmatpush1.msra.mxu0 0.0
        %1987 = vmatprep.subr.mxu0 0.0
        %1988 = vmatpush1.msra.mxu0 0.0
        %1989 = vmatprep.subr.mxu0 0.0
        %1990 = vmatpush1.msra.mxu0 0.0
        %1991 = vmatprep.subr.mxu0 0.0
        %1992 = vmatpush1.msra.mxu0 0.0
        %1993 = vmatprep.subr.mxu0 0.0
        %1994 = vmatpush1.msra.mxu0 0.0
        %1995 = vmatprep.subr.mxu0 0.0
        %1996 = vmatpush1.msra.mxu0 0.0
        %1997 = vmatprep.subr.mxu0 0.0
        %1998 = vmatpush1.msra.mxu0 0.0
        %1999 = vmatprep.subr.mxu0 0.0
        %2000 = vmatpush1.msra.mxu0 0.0
        %2001 = vmatprep.mubr.f32.mxu0 0.0
        %2002 = vmatmul.mubr.f32.gmra.mrb[0].mxu0 %v1908
        %v2003 = vpop.f32.mrb[0].mxu0
        %v2004 = vadd.f32 %v1935, %v2003
        %v2005 = vpop.f32.mrb[0].mxu0
        %2006 = vmatprep.mubr.f32.mxu0 0.0
        %2007 = vmatmul.mubr.f32.gmra.mrb[0].mxu0 %v1909
        %v2008 = vpop.f32.mrb[0].mxu0
        %v2009 = vadd.f32 %v1935, %v2008
        %v2010 = vpop.f32.mrb[0].mxu0
        %2011 = vmatprep.mubr.f32.mxu0 0.0
        %2012 = vmatmul.mubr.f32.gmra.mrb[0].mxu0 %v1910
        %v2013 = vpop.f32.mrb[0].mxu0
        %v2014 = vadd.f32 %v1935, %v2013
        %v2015 = vpop.f32.mrb[0].mxu0
        %2016 = vmatprep.mubr.f32.mxu0 0.0
        %2017 = vmatmul.mubr.f32.gmra.mrb[0].mxu0 %v1911
        %v2018 = vpop.f32.mrb[0].mxu0
        %v2019 = vadd.f32 %v1935, %v2018
        %v2020 = vpop.f32.mrb[0].mxu0
        %2021 = vdwg.mxu0
        %v2022 = vmax.f32 %v2004, 0.0
        %v2023 = vmax.f32 %v2009, 0.0
        %v2024 = vmax.f32 %v2014, 0.0
        %v2025 = vmax.f32 %v2019, 0.0
        %s2026 = scalar_lea.vmem %s459, 256
        %v2027 = vld [vmem:[%s2026] sm:$0xff]
        %v2028 = vld [vmem:[%s2026 + $0x8] sm:$0xff]
        %v2029 = vld [vmem:[%s2026 + $0x10] sm:$0xff]
        %v2030 = vld [vmem:[%s2026 + $0x18] sm:$0xff]
        %v2031 = vld [vmem:[%s2026 + $0x20] sm:$0xff]
        %v2032 = vld [vmem:[%s2026 + $0x28] sm:$0xff]
        %v2033 = vld [vmem:[%s2026 + $0x30] sm:$0xff]
        %v2034 = vld [vmem:[%s2026 + $0x38] sm:$0xff]
        %v2035 = vpack.c.bf16 %v2023, %v2022
        %v2036 = vpack.c.bf16 %v2025, %v2024
        %2037 = vmatprep.subr.bf16.mxu0 0
        %2038 = vmatpush1.bf16.msra.mxu0 %v2035
        %2039 = vmatprep.subr.bf16.mxu0 0
        %2040 = vmatpush1.bf16.msra.mxu0 %v2036
        %2041 = vmatprep.subr.bf16.mxu0 0
        %2042 = vmatpush1.bf16.msra.mxu0 0
        %2043 = vmatprep.subr.bf16.mxu0 0
        %2044 = vmatpush1.bf16.msra.mxu0 0
        %2045 = vmatprep.subr.bf16.mxu0 0
        %2046 = vmatpush1.bf16.msra.mxu0 0
        %2047 = vmatprep.subr.bf16.mxu0 0
        %2048 = vmatpush1.bf16.msra.mxu0 0
        %2049 = vmatprep.subr.bf16.mxu0 0
        %2050 = vmatpush1.bf16.msra.mxu0 0
        %2051 = vmatprep.subr.bf16.mxu0 0
        %2052 = vmatpush1.bf16.msra.mxu0 0
        %2053 = vmatprep.subr.bf16.mxu0 0
        %2054 = vmatpush1.bf16.msra.mxu0 0
        %2055 = vmatprep.subr.bf16.mxu0 0
        %2056 = vmatpush1.bf16.msra.mxu0 0
        %2057 = vmatprep.subr.bf16.mxu0 0
        %2058 = vmatpush1.bf16.msra.mxu0 0
        %2059 = vmatprep.subr.bf16.mxu0 0
        %2060 = vmatpush1.bf16.msra.mxu0 0
        %2061 = vmatprep.subr.bf16.mxu0 0
        %2062 = vmatpush1.bf16.msra.mxu0 0
        %2063 = vmatprep.subr.bf16.mxu0 0
        %2064 = vmatpush1.bf16.msra.mxu0 0
        %2065 = vmatprep.subr.bf16.mxu0 0
        %2066 = vmatpush1.bf16.msra.mxu0 0
        %2067 = vmatprep.subr.bf16.mxu0 0
        %2068 = vmatpush1.bf16.msra.mxu0 0
        %2069 = vmatprep.mubr.bf16.mxu0 0
        %2070 = vmatmul.mubr.bf16.gmra.mrb[0].mxu0 %v513
        %v2071 = vpop.f32.mrb[0].mxu0
        %v2072 = vadd.f32 %v2027, %v2071
        %v2073 = vpop.f32.mrb[0].mxu0
        %v2074 = vpop.f32.mrb[0].mxu0
        %v2075 = vadd.f32 %v2028, %v2074
        %v2076 = vpop.f32.mrb[0].mxu0
        %2077 = vmatprep.mubr.bf16.mxu0 0
        %2078 = vmatmul.mubr.bf16.gmra.mrb[0].mxu0 %v516
        %v2079 = vpop.f32.mrb[0].mxu0
        %v2080 = vadd.f32 %v2029, %v2079
        %v2081 = vpop.f32.mrb[0].mxu0
        %v2082 = vpop.f32.mrb[0].mxu0
        %v2083 = vadd.f32 %v2030, %v2082
        %v2084 = vpop.f32.mrb[0].mxu0
        %2085 = vmatprep.mubr.bf16.mxu0 0
        %2086 = vmatmul.mubr.bf16.gmra.mrb[0].mxu0 %v519
        %v2087 = vpop.f32.mrb[0].mxu0
        %v2088 = vadd.f32 %v2031, %v2087
        %v2089 = vpop.f32.mrb[0].mxu0
        %v2090 = vpop.f32.mrb[0].mxu0
        %v2091 = vadd.f32 %v2032, %v2090
        %v2092 = vpop.f32.mrb[0].mxu0
        %2093 = vmatprep.mubr.bf16.mxu0 0
        %2094 = vmatmul.mubr.bf16.gmra.mrb[0].mxu0 %v522
        %v2095 = vpop.f32.mrb[0].mxu0
        %v2096 = vadd.f32 %v2033, %v2095
        %v2097 = vpop.f32.mrb[0].mxu0
        %v2098 = vpop.f32.mrb[0].mxu0
        %v2099 = vadd.f32 %v2034, %v2098
        %v2100 = vpop.f32.mrb[0].mxu0
        %2101 = vdwg.mxu0
        %v2102 = vmax.f32 %v2072, 0.0
        %v2103 = vmax.f32 %v2075, 0.0
        %v2104 = vmax.f32 %v2080, 0.0
        %v2105 = vmax.f32 %v2083, 0.0
        %v2106 = vmax.f32 %v2088, 0.0
        %v2107 = vmax.f32 %v2091, 0.0
        %v2108 = vmax.f32 %v2096, 0.0
        %v2109 = vmax.f32 %v2099, 0.0
        %v2110 = vpack.c.bf16 %v2103, %v2102
        %v2111 = vpack.c.bf16 %v2105, %v2104
        %v2112 = vpack.c.bf16 %v2107, %v2106
        %v2113 = vpack.c.bf16 %v2109, %v2108
        %2114 = vmatprep.subr.bf16.mxu0 0
        %2115 = vmatpush1.bf16.msra.mxu0 %v2110
        %2116 = vmatprep.subr.bf16.mxu0 0
        %2117 = vmatpush1.bf16.msra.mxu0 %v2111
        %2118 = vmatprep.subr.bf16.mxu0 0
        %2119 = vmatpush1.bf16.msra.mxu0 %v2112
        %2120 = vmatprep.subr.bf16.mxu0 0
        %2121 = vmatpush1.bf16.msra.mxu0 %v2113
        %2122 = vmatprep.subr.bf16.mxu0 0
        %2123 = vmatpush1.bf16.msra.mxu0 0
        %2124 = vmatprep.subr.bf16.mxu0 0
        %2125 = vmatpush1.bf16.msra.mxu0 0
        %2126 = vmatprep.subr.bf16.mxu0 0
        %2127 = vmatpush1.bf16.msra.mxu0 0
        %2128 = vmatprep.subr.bf16.mxu0 0
        %2129 = vmatpush1.bf16.msra.mxu0 0
        %2130 = vmatprep.subr.bf16.mxu0 0
        %2131 = vmatpush1.bf16.msra.mxu0 0
        %2132 = vmatprep.subr.bf16.mxu0 0
        %2133 = vmatpush1.bf16.msra.mxu0 0
        %2134 = vmatprep.subr.bf16.mxu0 0
        %2135 = vmatpush1.bf16.msra.mxu0 0
        %2136 = vmatprep.subr.bf16.mxu0 0
        %2137 = vmatpush1.bf16.msra.mxu0 0
        %2138 = vmatprep.subr.bf16.mxu0 0
        %2139 = vmatpush1.bf16.msra.mxu0 0
        %2140 = vmatprep.subr.bf16.mxu0 0
        %2141 = vmatpush1.bf16.msra.mxu0 0
        %2142 = vmatprep.subr.bf16.mxu0 0
        %2143 = vmatpush1.bf16.msra.mxu0 0
        %2144 = vmatprep.subr.bf16.mxu0 0
        %2145 = vmatpush1.bf16.msra.mxu0 0
        %2146 = vmatprep.mubr.bf16.mxu0 0
        %2147 = vmatmul.mubr.bf16.gmra.mrb[0].mxu0 %v613
        %v2148 = vpop.f32.mrb[0].mxu0
        %v2149 = vadd.f32 0.0, %v2148
        %v2150 = vpop.f32.mrb[0].mxu0
        %v2151 = vpop.f32.mrb[0].mxu0
        %v2152 = vadd.f32 0.0, %v2151
        %v2153 = vpop.f32.mrb[0].mxu0
        %2154 = vmatprep.mubr.bf16.mxu0 0
        %2155 = vmatmul.mubr.bf16.gmra.mrb[0].mxu0 %v616
        %v2156 = vpop.f32.mrb[0].mxu0
        %v2157 = vadd.f32 0.0, %v2156
        %v2158 = vpop.f32.mrb[0].mxu0
        %v2159 = vpop.f32.mrb[0].mxu0
        %v2160 = vadd.f32 0.0, %v2159
        %v2161 = vpop.f32.mrb[0].mxu0
        %2162 = vdwg.mxu0
        %s2163 = sld [smem:[#allocation2 + $0x4]]
        %v2164 = vstv %s2163
        %v2165 = vmul.f32 %v2164, %v2022
        %v2166 = vmul.f32 %v2164, %v2023
        %v2167 = vmul.f32 %v2164, %v2024
        %v2168 = vmul.f32 %v2164, %v2025
        %v2169 = vadd.f32 %v2165, %v2149
        %v2170 = vadd.f32 %v2166, %v2152
        %v2171 = vadd.f32 %v2167, %v2157
        %v2172 = vadd.f32 %v2168, %v2160
        %s2173 = scalar_lea.vmem %s6, 512
        %v2174 = vld [vmem:[%s2173] sm:$0xff]
        %v2175 = vld [vmem:[%s2173 + $0x8] sm:$0xff]
        %v2176 = vld [vmem:[%s2173 + $0x10] sm:$0xff]
        %v2177 = vld [vmem:[%s2173 + $0x18] sm:$0xff]
        %v2178 = vld [vmem:[%s2173 + $0x20] sm:$0xff]
        %v2179 = vld [vmem:[%s2173 + $0x28] sm:$0xff]
        %v2180 = vld [vmem:[%s2173 + $0x30] sm:$0xff]
        %v2181 = vld [vmem:[%s2173 + $0x38] sm:$0xff]
        %v2182 = vld [vmem:[%s2173 + $0x40] sm:$0xff]
        %v2183 = vld [vmem:[%s2173 + $0x48] sm:$0xff]
        %v2184 = vld [vmem:[%s2173 + $0x50] sm:$0xff]
        %v2185 = vld [vmem:[%s2173 + $0x58] sm:$0xff]
        %v2186 = vld [vmem:[%s2173 + $0x60] sm:$0xff]
        %v2187 = vld [vmem:[%s2173 + $0x68] sm:$0xff]
        %v2188 = vld [vmem:[%s2173 + $0x70] sm:$0xff]
        %v2189 = vld [vmem:[%s2173 + $0x78] sm:$0xff]
        %s2190 = scalar_lea.vmem %s7, 4
        %v2191 = vld [vmem:[%s2190] sm:$0x1]
        %v2193 = vlaneseq
        %v2194 = vshrl.u32 %v2193, 7
        %v2195 = vsub.s32 0, %v2194
        %v2196 = vrot.slane %v2191, %v2195
        %2198 = vmatprep.subr.mxu0 0.0
        %2199 = vmatpush1.msra.mxu0 %v2174
        %2200 = vmatprep.subr.mxu0 0.0
        %2201 = vmatpush1.msra.mxu0 %v2175
        %2202 = vmatprep.subr.mxu0 0.0
        %2203 = vmatpush1.msra.mxu0 %v2176
        %2204 = vmatprep.subr.mxu0 0.0
        %2205 = vmatpush1.msra.mxu0 %v2177
        %2206 = vmatprep.subr.mxu0 0.0
        %2207 = vmatpush1.msra.mxu0 %v2178
        %2208 = vmatprep.subr.mxu0 0.0
        %2209 = vmatpush1.msra.mxu0 %v2179
        %2210 = vmatprep.subr.mxu0 0.0
        %2211 = vmatpush1.msra.mxu0 %v2180
        %2212 = vmatprep.subr.mxu0 0.0
        %2213 = vmatpush1.msra.mxu0 %v2181
        %2214 = vmatprep.subr.mxu0 0.0
        %2215 = vmatpush1.msra.mxu0 %v2182
        %2216 = vmatprep.subr.mxu0 0.0
        %2217 = vmatpush1.msra.mxu0 %v2183
        %2218 = vmatprep.subr.mxu0 0.0
        %2219 = vmatpush1.msra.mxu0 %v2184
        %2220 = vmatprep.subr.mxu0 0.0
        %2221 = vmatpush1.msra.mxu0 %v2185
        %2222 = vmatprep.subr.mxu0 0.0
        %2223 = vmatpush1.msra.mxu0 %v2186
        %2224 = vmatprep.subr.mxu0 0.0
        %2225 = vmatpush1.msra.mxu0 %v2187
        %2226 = vmatprep.subr.mxu0 0.0
        %2227 = vmatpush1.msra.mxu0 %v2188
        %2228 = vmatprep.subr.mxu0 0.0
        %2229 = vmatpush1.msra.mxu0 %v2189
        %2230 = vmatprep.subr.mxu0 0.0
        %2231 = vmatpush1.msra.mxu0 0.0
        %2232 = vmatprep.subr.mxu0 0.0
        %2233 = vmatpush1.msra.mxu0 0.0
        %2234 = vmatprep.subr.mxu0 0.0
        %2235 = vmatpush1.msra.mxu0 0.0
        %2236 = vmatprep.subr.mxu0 0.0
        %2237 = vmatpush1.msra.mxu0 0.0
        %2238 = vmatprep.subr.mxu0 0.0
        %2239 = vmatpush1.msra.mxu0 0.0
        %2240 = vmatprep.subr.mxu0 0.0
        %2241 = vmatpush1.msra.mxu0 0.0
        %2242 = vmatprep.subr.mxu0 0.0
        %2243 = vmatpush1.msra.mxu0 0.0
        %2244 = vmatprep.subr.mxu0 0.0
        %2245 = vmatpush1.msra.mxu0 0.0
        %2246 = vmatprep.subr.mxu0 0.0
        %2247 = vmatpush1.msra.mxu0 0.0
        %2248 = vmatprep.subr.mxu0 0.0
        %2249 = vmatpush1.msra.mxu0 0.0
        %2250 = vmatprep.subr.mxu0 0.0
        %2251 = vmatpush1.msra.mxu0 0.0
        %2252 = vmatprep.subr.mxu0 0.0
        %2253 = vmatpush1.msra.mxu0 0.0
        %2254 = vmatprep.subr.mxu0 0.0
        %2255 = vmatpush1.msra.mxu0 0.0
        %2256 = vmatprep.subr.mxu0 0.0
        %2257 = vmatpush1.msra.mxu0 0.0
        %2258 = vmatprep.subr.mxu0 0.0
        %2259 = vmatpush1.msra.mxu0 0.0
        %2260 = vmatprep.subr.mxu0 0.0
        %2261 = vmatpush1.msra.mxu0 0.0
        %2262 = vmatprep.mubr.f32.mxu0 0.0
        %2263 = vmatmul.mubr.f32.gmra.mrb[0].mxu0 %v2169
        %v2264 = vpop.f32.mrb[0].mxu0
        %v2265 = vadd.f32 %v2196, %v2264
        %v2266 = vpop.f32.mrb[0].mxu0
        %2267 = vmatprep.mubr.f32.mxu0 0.0
        %2268 = vmatmul.mubr.f32.gmra.mrb[0].mxu0 %v2170
        %v2269 = vpop.f32.mrb[0].mxu0
        %v2270 = vadd.f32 %v2196, %v2269
        %v2271 = vpop.f32.mrb[0].mxu0
        %2272 = vmatprep.mubr.f32.mxu0 0.0
        %2273 = vmatmul.mubr.f32.gmra.mrb[0].mxu0 %v2171
        %v2274 = vpop.f32.mrb[0].mxu0
        %v2275 = vadd.f32 %v2196, %v2274
        %v2276 = vpop.f32.mrb[0].mxu0
        %2277 = vmatprep.mubr.f32.mxu0 0.0
        %2278 = vmatmul.mubr.f32.gmra.mrb[0].mxu0 %v2172
        %v2279 = vpop.f32.mrb[0].mxu0
        %v2280 = vadd.f32 %v2196, %v2279
        %v2281 = vpop.f32.mrb[0].mxu0
        %2282 = vdwg.mxu0
        %v2283 = vmax.f32 %v2265, 0.0
        %v2284 = vmax.f32 %v2270, 0.0
        %v2285 = vmax.f32 %v2275, 0.0
        %v2286 = vmax.f32 %v2280, 0.0
        %s2287 = scalar_lea.vmem [#allocation5], 512
        %v2288 = vld [vmem:[%s2287] sm:$0xff]
        %v2289 = vld [vmem:[%s2287 + $0x8] sm:$0xff]
        %v2290 = vld [vmem:[%s2287 + $0x10] sm:$0xff]
        %v2291 = vld [vmem:[%s2287 + $0x18] sm:$0xff]
        %v2292 = vld [vmem:[%s2287 + $0x20] sm:$0xff]
        %v2293 = vld [vmem:[%s2287 + $0x28] sm:$0xff]
        %v2294 = vld [vmem:[%s2287 + $0x30] sm:$0xff]
        %v2295 = vld [vmem:[%s2287 + $0x38] sm:$0xff]
        %v2296 = vld [vmem:[%s2287 + $0x40] sm:$0xff]
        %v2297 = vld [vmem:[%s2287 + $0x48] sm:$0xff]
        %v2298 = vld [vmem:[%s2287 + $0x50] sm:$0xff]
        %v2299 = vld [vmem:[%s2287 + $0x58] sm:$0xff]
        %v2300 = vld [vmem:[%s2287 + $0x60] sm:$0xff]
        %v2301 = vld [vmem:[%s2287 + $0x68] sm:$0xff]
        %v2302 = vld [vmem:[%s2287 + $0x70] sm:$0xff]
        %v2303 = vld [vmem:[%s2287 + $0x78] sm:$0xff]
        %s2304 = scalar_lea.vmem %s9, 4
        %v2305 = vld [vmem:[%s2304] sm:$0x1]
        %v2307 = vlaneseq
        %v2308 = vshrl.u32 %v2307, 7
        %v2309 = vsub.s32 0, %v2308
        %v2310 = vrot.slane %v2305, %v2309
        %2312 = vmatprep.subr.mxu0 0.0
        %2313 = vmatpush1.msra.mxu0 %v2288
        %2314 = vmatprep.subr.mxu0 0.0
        %2315 = vmatpush1.msra.mxu0 %v2289
        %2316 = vmatprep.subr.mxu0 0.0
        %2317 = vmatpush1.msra.mxu0 %v2290
        %2318 = vmatprep.subr.mxu0 0.0
        %2319 = vmatpush1.msra.mxu0 %v2291
        %2320 = vmatprep.subr.mxu0 0.0
        %2321 = vmatpush1.msra.mxu0 %v2292
        %2322 = vmatprep.subr.mxu0 0.0
        %2323 = vmatpush1.msra.mxu0 %v2293
        %2324 = vmatprep.subr.mxu0 0.0
        %2325 = vmatpush1.msra.mxu0 %v2294
        %2326 = vmatprep.subr.mxu0 0.0
        %2327 = vmatpush1.msra.mxu0 %v2295
        %2328 = vmatprep.subr.mxu0 0.0
        %2329 = vmatpush1.msra.mxu0 %v2296
        %2330 = vmatprep.subr.mxu0 0.0
        %2331 = vmatpush1.msra.mxu0 %v2297
        %2332 = vmatprep.subr.mxu0 0.0
        %2333 = vmatpush1.msra.mxu0 %v2298
        %2334 = vmatprep.subr.mxu0 0.0
        %2335 = vmatpush1.msra.mxu0 %v2299
        %2336 = vmatprep.subr.mxu0 0.0
        %2337 = vmatpush1.msra.mxu0 %v2300
        %2338 = vmatprep.subr.mxu0 0.0
        %2339 = vmatpush1.msra.mxu0 %v2301
        %2340 = vmatprep.subr.mxu0 0.0
        %2341 = vmatpush1.msra.mxu0 %v2302
        %2342 = vmatprep.subr.mxu0 0.0
        %2343 = vmatpush1.msra.mxu0 %v2303
        %2344 = vmatprep.subr.mxu0 0.0
        %2345 = vmatpush1.msra.mxu0 0.0
        %2346 = vmatprep.subr.mxu0 0.0
        %2347 = vmatpush1.msra.mxu0 0.0
        %2348 = vmatprep.subr.mxu0 0.0
        %2349 = vmatpush1.msra.mxu0 0.0
        %2350 = vmatprep.subr.mxu0 0.0
        %2351 = vmatpush1.msra.mxu0 0.0
        %2352 = vmatprep.subr.mxu0 0.0
        %2353 = vmatpush1.msra.mxu0 0.0
        %2354 = vmatprep.subr.mxu0 0.0
        %2355 = vmatpush1.msra.mxu0 0.0
        %2356 = vmatprep.subr.mxu0 0.0
        %2357 = vmatpush1.msra.mxu0 0.0
        %2358 = vmatprep.subr.mxu0 0.0
        %2359 = vmatpush1.msra.mxu0 0.0
        %2360 = vmatprep.subr.mxu0 0.0
        %2361 = vmatpush1.msra.mxu0 0.0
        %2362 = vmatprep.subr.mxu0 0.0
        %2363 = vmatpush1.msra.mxu0 0.0
        %2364 = vmatprep.subr.mxu0 0.0
        %2365 = vmatpush1.msra.mxu0 0.0
        %2366 = vmatprep.subr.mxu0 0.0
        %2367 = vmatpush1.msra.mxu0 0.0
        %2368 = vmatprep.subr.mxu0 0.0
        %2369 = vmatpush1.msra.mxu0 0.0
        %2370 = vmatprep.subr.mxu0 0.0
        %2371 = vmatpush1.msra.mxu0 0.0
        %2372 = vmatprep.subr.mxu0 0.0
        %2373 = vmatpush1.msra.mxu0 0.0
        %2374 = vmatprep.subr.mxu0 0.0
        %2375 = vmatpush1.msra.mxu0 0.0
        %2376 = vmatprep.mubr.f32.mxu0 0.0
        %2377 = vmatmul.mubr.f32.gmra.mrb[0].mxu0 %v2283
        %v2378 = vpop.f32.mrb[0].mxu0
        %v2379 = vadd.f32 %v2310, %v2378
        %v2380 = vpop.f32.mrb[0].mxu0
        %2381 = vmatprep.mubr.f32.mxu0 0.0
        %2382 = vmatmul.mubr.f32.gmra.mrb[0].mxu0 %v2284
        %v2383 = vpop.f32.mrb[0].mxu0
        %v2384 = vadd.f32 %v2310, %v2383
        %v2385 = vpop.f32.mrb[0].mxu0
        %2386 = vmatprep.mubr.f32.mxu0 0.0
        %2387 = vmatmul.mubr.f32.gmra.mrb[0].mxu0 %v2285
        %v2388 = vpop.f32.mrb[0].mxu0
        %v2389 = vadd.f32 %v2310, %v2388
        %v2390 = vpop.f32.mrb[0].mxu0
        %2391 = vmatprep.mubr.f32.mxu0 0.0
        %2392 = vmatmul.mubr.f32.gmra.mrb[0].mxu0 %v2286
        %v2393 = vpop.f32.mrb[0].mxu0
        %v2394 = vadd.f32 %v2310, %v2393
        %v2395 = vpop.f32.mrb[0].mxu0
        %2396 = vdwg.mxu0
        %v2397 = vmax.f32 %v2379, 0.0
        %v2398 = vmax.f32 %v2384, 0.0
        %v2399 = vmax.f32 %v2389, 0.0
        %v2400 = vmax.f32 %v2394, 0.0
        %v2401 = vld [vmem:[%s454] sm:$0xf]
        %v2403 = vsel %vm511, %v2401, 0
        %2405 = vmatprep.subr.mxu0 0.0
        %2406 = vmatpush1.msra.mxu0 %v2397
        %2407 = vmatprep.subr.mxu0 0.0
        %2408 = vmatpush1.msra.mxu0 %v2398
        %2409 = vmatprep.subr.mxu0 0.0
        %2410 = vmatpush1.msra.mxu0 %v2399
        %2411 = vmatprep.subr.mxu0 0.0
        %2412 = vmatpush1.msra.mxu0 %v2400
        %2413 = vmatprep.subr.mxu0 0.0
        %2414 = vmatpush1.msra.mxu0 0.0
        %2415 = vmatprep.subr.mxu0 0.0
        %2416 = vmatpush1.msra.mxu0 0.0
        %2417 = vmatprep.subr.mxu0 0.0
        %2418 = vmatpush1.msra.mxu0 0.0
        %2419 = vmatprep.subr.mxu0 0.0
        %2420 = vmatpush1.msra.mxu0 0.0
        %2421 = vmatprep.subr.mxu0 0.0
        %2422 = vmatpush1.msra.mxu0 0.0
        %2423 = vmatprep.subr.mxu0 0.0
        %2424 = vmatpush1.msra.mxu0 0.0
        %2425 = vmatprep.subr.mxu0 0.0
        %2426 = vmatpush1.msra.mxu0 0.0
        %2427 = vmatprep.subr.mxu0 0.0
        %2428 = vmatpush1.msra.mxu0 0.0
        %2429 = vmatprep.subr.mxu0 0.0
        %2430 = vmatpush1.msra.mxu0 0.0
        %2431 = vmatprep.subr.mxu0 0.0
        %2432 = vmatpush1.msra.mxu0 0.0
        %2433 = vmatprep.subr.mxu0 0.0
        %2434 = vmatpush1.msra.mxu0 0.0
        %2435 = vmatprep.subr.mxu0 0.0
        %2436 = vmatpush1.msra.mxu0 0.0
        %2437 = vmatprep.subr.mxu0 0.0
        %2438 = vmatpush1.msra.mxu0 0.0
        %2439 = vmatprep.subr.mxu0 0.0
        %2440 = vmatpush1.msra.mxu0 0.0
        %2441 = vmatprep.subr.mxu0 0.0
        %2442 = vmatpush1.msra.mxu0 0.0
        %2443 = vmatprep.subr.mxu0 0.0
        %2444 = vmatpush1.msra.mxu0 0.0
        %2445 = vmatprep.subr.mxu0 0.0
        %2446 = vmatpush1.msra.mxu0 0.0
        %2447 = vmatprep.subr.mxu0 0.0
        %2448 = vmatpush1.msra.mxu0 0.0
        %2449 = vmatprep.subr.mxu0 0.0
        %2450 = vmatpush1.msra.mxu0 0.0
        %2451 = vmatprep.subr.mxu0 0.0
        %2452 = vmatpush1.msra.mxu0 0.0
        %2453 = vmatprep.subr.mxu0 0.0
        %2454 = vmatpush1.msra.mxu0 0.0
        %2455 = vmatprep.subr.mxu0 0.0
        %2456 = vmatpush1.msra.mxu0 0.0
        %2457 = vmatprep.subr.mxu0 0.0
        %2458 = vmatpush1.msra.mxu0 0.0
        %2459 = vmatprep.subr.mxu0 0.0
        %2460 = vmatpush1.msra.mxu0 0.0
        %2461 = vmatprep.subr.mxu0 0.0
        %2462 = vmatpush1.msra.mxu0 0.0
        %2463 = vmatprep.subr.mxu0 0.0
        %2464 = vmatpush1.msra.mxu0 0.0
        %2465 = vmatprep.subr.mxu0 0.0
        %2466 = vmatpush1.msra.mxu0 0.0
        %2467 = vmatprep.subr.mxu0 0.0
        %2468 = vmatpush1.msra.mxu0 0.0
        %2469 = vmatprep.mubr.f32.mxu0 0.0
        %2470 = vmatmul.mubr.f32.gmra.mrb[0].mxu0 %v2403
        %v2471 = vpop.f32.mrb[0].mxu0
        %v2472 = vadd.f32 0.0, %v2471
        %v2473 = vpop.f32.mrb[0].mxu0
        %2474 = vdwg.mxu0
        %2475 = vst [vmem:[%s463] sm:$0xf] %v2472
        %p2476 = scmp.lt.s32.totalorder %s23, 1
        %s2477 = scalar_select %p2476, %s23, 1
        %s2478 = smul.addr %s2477, 4
        %s2479 = scalar_lea.vmem %s10, %s2478
        // Predicated region
        $region69: #{gine_forward.1} parent=59 // pred_check
          %p2480 = pneg %p276
        $region70: #{gine_forward.1} parent=59 // pred_check_branch
          %2482 = sbr.rel (%p2480) target = $region72
        $region71: #{gine_forward.1} parent=59 // pred_region
          _
        $region72: #{gine_forward.1} parent=59 // pred_fallthru
          _
      $region60: #{gine_forward.1} parent=5 // pred_fallthru
        _
      %p2483 = scmp.le.s32.totalorder 2, %s18
      // Predicated region
      $region73: #{gine_forward.1} parent=5 // pred_check
        %p2484 = pneg %p2483
      $region74: #{gine_forward.1} parent=5 // pred_check_branch
        %2486 = sbr.rel (%p2484) target = $region76
      $region75: #{gine_forward.1} parent=5 // pred_region
        %s2487 = ssub.s32 %s18, 2
        // Predicated region
        $region77: #{gine_forward.1} parent=75 // pred_check
          %p2488 = pneg %p282
        $region78: #{gine_forward.1} parent=75 // pred_check_branch
          %2490 = sbr.rel (%p2488) target = $region80
        $region79: #{gine_forward.1} parent=75 // pred_region
          %p2491 = scmp.lt.s32.totalorder %s24, 1
          %s2492 = scalar_select %p2491, %s24, 1
          %s2493 = smul.addr %s2492, 4
          %s2494 = scalar_lea.vmem %s10, %s2493
        $region80: #{gine_forward.1} parent=75 // pred_fallthru
          _
      $region76: #{gine_forward.1} parent=5 // pred_fallthru
        _
    $region6: #{gine_forward.1} parent=1 // loop_footer
      %s22 = sadd.s32 1, %s18
    $region7: #{gine_forward.1} parent=1 // loop_footer_branch
      %17 = sbr.rel target = $region3
    $region8: #{gine_forward.1} parent=1 // loop_exit
      _
    %2495 = vsyncpa [#allocation3], 1
    %s2496 = scalar_lea.sflag [#allocation3], 1
    %2497 = vsyncpa %s2496, 1
    %2498 = vsyncpa [#allocation4], 1
    %s2499 = scalar_lea.sflag [#allocation4], 1
    %2500 = vsyncpa %s2499, 1

</llo_original>
